<compile_context>
chip_gen: v6e
topology: v6e:2x2x1
jax: 0.10.0
libtpu: 0.0.40
codegen_flags: <defaults>
</compile_context>

<pallas_src>
import jax
import jax.numpy as jnp
from jax.experimental import pallas as pl
from jax.experimental.pallas import tpu as pltpu


PACK = 32                 # batch rows fused into one lane-dense super-row
IN, HID, OUT = 6, 64, 4   # FinalNN dims: Linear(6,64) -> ReLU -> Linear(64,4)


def _round_up(n, m):
    return ((n + m - 1) // m) * m


def _mlp_kernel(x_ref, w1_ref, b1_ref, w2_ref, b2_ref, o_ref):
    # x_ref: (tile_r, PACK*IN) f32; w*_ref: resident block-diag bf16; b*_ref: f32.
    x = x_ref[...].astype(jnp.bfloat16)                               # bf16 MXU input
    h = jnp.dot(x, w1_ref[...], preferred_element_type=jnp.float32)   # (tile_r, PACK*HID) f32
    h = jnp.maximum(h + b1_ref[...], 0.0).astype(jnp.bfloat16)        # bias + ReLU, bf16 for 2nd MXU pass
    y = jnp.dot(h, w2_ref[...], preferred_element_type=jnp.float32)   # (tile_r, PACK*OUT) f32
    o_ref[...] = (y + b2_ref[...]).astype(o_ref.dtype)                # lane-dense (128-wide) store


def pack_weights(w1, b1, w2, b2, pack=PACK):
    """Expand (in,out)-layout weights into resident block-diagonal bf16 matrices.

    W1_bd[p*IN+k, q*HID+j] = w1[k, j] if p == q else 0   (shape (pack*IN, pack*HID))
    W2_bd[p*HID+h, q*OUT+o] = w2[h, o] if p == q else 0  (shape (pack*HID, pack*OUT))
    Biases are tiled to match the packed feature layout.  Done once per weight set.
    """
    eye = jnp.eye(pack, dtype=jnp.float32)
    w1_bd = jnp.einsum("pq,kj->pkqj", eye, w1.astype(jnp.float32))
    w1_bd = w1_bd.reshape(pack * IN, pack * HID).astype(jnp.bfloat16)
    w2_bd = jnp.einsum("pq,hj->phqj", eye, w2.astype(jnp.float32))
    w2_bd = w2_bd.reshape(pack * HID, pack * OUT).astype(jnp.bfloat16)
    b1_bd = jnp.tile(b1.astype(jnp.float32), pack).reshape(1, pack * HID)
    b2_bd = jnp.tile(b2.astype(jnp.float32), pack).reshape(1, pack * OUT)
    return w1_bd, b1_bd, w2_bd, b2_bd


def final_nn_forward_pallas(x, w1, b1, w2, b2, *, pack=PACK, max_tile_r=256, min_steps=16):
    """x: (B, 6) f32 -> (B, 4) f32 via the lane-dense packed Pallas kernel."""
    B = x.shape[0]
    assert x.shape[1] == IN and w1.shape == (IN, HID) and w2.shape == (HID, OUT)

    # Pad only to the next multiple of PACK (<= pack-1 rows); the common case
    # (B % pack == 0) has zero extra HBM traffic and no output slice.
    B_pad = _round_up(B, pack)
    x_p = jnp.pad(x, ((0, B_pad - B), (0, 0))) if B_pad != B else x
    n_rows = B_pad // pack
    x_packed = x_p.reshape(n_rows, pack * IN)          # zero-copy row-major reshape

    w1_bd, b1_bd, w2_bd, b2_bd = pack_weights(w1, b1, w2, b2, pack)

    # Batch tile: multiple of 8 (f32 sublane rule), >= min_steps grid steps,
    # capped so live VMEM (x/out double-buffers + resident weights + f32 hidden
    # temp) stays well under the smallest scoped-VMEM default (v5e: 16 MiB).
    tile_r = min(max_tile_r, max(8, _round_up(pl.cdiv(n_rows, min_steps), 8)))
    if tile_r > n_rows:
        tile_r = n_rows                                # single full-array block (small batch)
    num_tiles = pl.cdiv(n_rows, tile_r)                # ragged last block: Pallas masks OOB stores
    # (v7x note: an even num_tiles balances the two TensorCores; left as-is here
    #  since the ragged-grid path keeps the wrapper free of full-tile padding.)

    cost = pl.CostEstimate(
        flops=2 * n_rows * pack * pack * (IN * HID + HID * OUT),
        bytes_accessed=(x_packed.size * 4 + n_rows * pack * OUT * 4
                        + w1_bd.size * 2 + w2_bd.size * 2
                        + b1_bd.size * 4 + b2_bd.size * 4),
        transcendentals=0,
    )

    out_packed = pl.pallas_call(
        _mlp_kernel,
        out_shape=jax.ShapeDtypeStruct((n_rows, pack * OUT), jnp.float32),
        grid=(num_tiles,),
        in_specs=[
            pl.BlockSpec((tile_r, pack * IN), lambda i: (i, 0)),      # streamed batch tile
            pl.BlockSpec((pack * IN, pack * HID), lambda i: (0, 0)),  # resident block-diag W1 (bf16)
            pl.BlockSpec((1, pack * HID), lambda i: (0, 0)),          # resident b1
            pl.BlockSpec((pack * HID, pack * OUT), lambda i: (0, 0)), # resident block-diag W2 (bf16)
            pl.BlockSpec((1, pack * OUT), lambda i: (0, 0)),          # resident b2
        ],
        out_specs=pl.BlockSpec((tile_r, pack * OUT), lambda i: (i, 0)),  # lane-dense output
        compiler_params=pltpu.CompilerParams(
            dimension_semantics=("parallel",),         # shard batch tiles across v7x's two TCs
        ),
        cost_estimate=cost,
    )(x_packed, w1_bd, b1_bd, w2_bd, b2_bd)

    out = out_packed.reshape(B_pad, OUT)
    return out[:B] if B_pad != B else out


def reference_forward(x, w1, b1, w2, b2):
    h = jnp.maximum(x @ w1 + b1, 0.0)
    return h @ w2 + b2


# For tiny batches the pallas_call launch overhead dwarfs ~1.3 KFLOP/row of work;
# plain fused XLA wins, so dispatch on batch size (demo below calls the kernel directly).
_MIN_PALLAS_BATCH = 1024


def final_nn_forward(x, w1, b1, w2, b2):
    if x.shape[0] < _MIN_PALLAS_BATCH:
        return reference_forward(x, w1, b1, w2, b2)
    return final_nn_forward_pallas(x, w1, b1, w2, b2)


def init_params(key):
    """Deterministic init matching nn.Linear defaults (U(-1/sqrt(fan_in), +))."""
    k1, k2, k3, k4 = jax.random.split(key, 4)
    bound1 = 1.0 / jnp.sqrt(6.0)
    bound2 = 1.0 / jnp.sqrt(64.0)
    w1 = jax.random.uniform(k1, (IN, HID), jnp.float32, -bound1, bound1)
    b1 = jax.random.uniform(k2, (HID,), jnp.float32, -bound1, bound1)
    w2 = jax.random.uniform(k3, (HID, OUT), jnp.float32, -bound2, bound2)
    b2 = jax.random.uniform(k4, (OUT,), jnp.float32, -bound2, bound2)
    return w1, b1, w2, b2


if __name__ == "__main__":
    key = jax.random.PRNGKey(0)
    k_x1, k_x2, k_p = jax.random.split(key, 3)
    w1, b1, w2, b2 = init_params(k_p)

    # Small batch, multiple of PACK: no padding, single grid step.
    x_small = jax.random.normal(k_x1, (256, IN), jnp.float32)
    out_small = jax.block_until_ready(final_nn_forward_pallas(x_small, w1, b1, w2, b2))
    ref_small = reference_forward(x_small, w1, b1, w2, b2)
    assert out_small.shape == (256, OUT)
    # bf16-MXU tolerance (both matmuls run bf16 inputs / f32 accumulation).
    assert jnp.allclose(out_small, ref_small, atol=3e-2, rtol=3e-2), float(
        jnp.max(jnp.abs(out_small - ref_small)))

    # Ragged batch: exercises the <=31-row PACK pad, multi-step grid and
    # the ragged (masked) last block.
    x_big = jax.random.normal(k_x2, (2000, IN), jnp.float32)
    out_big = jax.block_until_ready(final_nn_forward_pallas(x_big, w1, b1, w2, b2))
    ref_big = reference_forward(x_big, w1, b1, w2, b2)
    assert out_big.shape == (2000, OUT)
    assert jnp.allclose(out_big, ref_big, atol=3e-2, rtol=3e-2), float(
        jnp.max(jnp.abs(out_big - ref_big)))

    print("KERNEL_OK")
</pallas_src>

<mosaic_0001>
module attributes {stable_mosaic.version = 11 : i64} {
  func.func @_mlp_kernel(%arg0: i32, %arg1: memref<8x192xf32, #tpu.memory_space<vmem>>, %arg2: memref<192x2048xbf16, #tpu.memory_space<vmem>>, %arg3: memref<1x2048xf32, #tpu.memory_space<vmem>>, %arg4: memref<2048x128xbf16, #tpu.memory_space<vmem>>, %arg5: memref<1x128xf32, #tpu.memory_space<vmem>>, %arg6: memref<8x128xf32, #tpu.memory_space<vmem>>) attributes {dimension_semantics = [#tpu.dimension_semantics<parallel>], iteration_bounds = array<i64: 1>, scalar_prefetch = 0 : i64, scratch_operands = 0 : i64, tpu.core_type = #tpu.core_type<tc>, window_params = [{transform_indices = @transform_0, window_bounds = array<i64: 8, 192>}, {pipeline_mode = #tpu.pipeline_mode<synchronous>, transform_indices = @transform_1, window_bounds = array<i64: 192, 2048>}, {pipeline_mode = #tpu.pipeline_mode<synchronous>, transform_indices = @transform_2, window_bounds = array<i64: 1, 2048>}, {pipeline_mode = #tpu.pipeline_mode<synchronous>, transform_indices = @transform_3, window_bounds = array<i64: 2048, 128>}, {pipeline_mode = #tpu.pipeline_mode<synchronous>, transform_indices = @transform_4, window_bounds = array<i64: 1, 128>}, {transform_indices = @transform_5, window_bounds = array<i64: 8, 128>}]} {
    %c0 = arith.constant 0 : index
    %c0_0 = arith.constant 0 : index
    %0 = vector.load %arg1[%c0, %c0_0] : memref<8x192xf32, #tpu.memory_space<vmem>>, vector<8x192xf32>
    %1 = arith.truncf %0 : vector<8x192xf32> to vector<8x192xbf16>
    %c0_1 = arith.constant 0 : index
    %c0_2 = arith.constant 0 : index
    %2 = vector.load %arg2[%c0_1, %c0_2] : memref<192x2048xbf16, #tpu.memory_space<vmem>>, vector<192x2048xbf16>
    %cst = arith.constant dense<0.000000e+00> : vector<8x2048xf32>
    %3 = tpu.matmul %1, %2, %cst {dimension_numbers = #tpu.dot_dimension_numbers<[1], [0], [0], [1], [0, 0, 1, 1], [], []>} : vector<8x192xbf16>, vector<192x2048xbf16>, vector<8x2048xf32> -> vector<8x2048xf32>
    %c0_3 = arith.constant 0 : index
    %c0_4 = arith.constant 0 : index
    %4 = vector.load %arg3[%c0_3, %c0_4] : memref<1x2048xf32, #tpu.memory_space<vmem>>, vector<1x2048xf32>
    %5 = vector.broadcast %4 : vector<1x2048xf32> to vector<8x2048xf32>
    %6 = arith.addf %3, %5 : vector<8x2048xf32>
    %cst_5 = arith.constant 0.000000e+00 : f32
    %7 = vector.broadcast %cst_5 : f32 to vector<8x2048xf32>
    %8 = arith.maximumf %6, %7 : vector<8x2048xf32>
    %9 = arith.truncf %8 : vector<8x2048xf32> to vector<8x2048xbf16>
    %c0_6 = arith.constant 0 : index
    %c0_7 = arith.constant 0 : index
    %10 = vector.load %arg4[%c0_6, %c0_7] : memref<2048x128xbf16, #tpu.memory_space<vmem>>, vector<2048x128xbf16>
    %cst_8 = arith.constant dense<0.000000e+00> : vector<8x128xf32>
    %11 = tpu.matmul %9, %10, %cst_8 {dimension_numbers = #tpu.dot_dimension_numbers<[1], [0], [0], [1], [0, 0, 1, 1], [], []>} : vector<8x2048xbf16>, vector<2048x128xbf16>, vector<8x128xf32> -> vector<8x128xf32>
    %c0_9 = arith.constant 0 : index
    %c0_10 = arith.constant 0 : index
    %12 = vector.load %arg5[%c0_9, %c0_10] : memref<1x128xf32, #tpu.memory_space<vmem>>, vector<1x128xf32>
    %13 = vector.broadcast %12 : vector<1x128xf32> to vector<8x128xf32>
    %14 = arith.addf %11, %13 : vector<8x128xf32>
    %c0_11 = arith.constant 0 : index
    %c0_12 = arith.constant 0 : index
    %15 = vector.load %arg6[%c0_11, %c0_12] : memref<8x128xf32, #tpu.memory_space<vmem>>, vector<8x128xf32>
    tpu.vector_store %arg6[%c0_11, %c0_12], %14 {strides = array<i32>} : memref<8x128xf32, #tpu.memory_space<vmem>>, vector<8x128xf32>,
    return
  }
  func.func @transform_0(%arg0: i32) -> (i32, i32) {
    %c0_i32 = arith.constant 0 : i32
    %c0_i32_0 = arith.constant 0 : i32
    return %arg0, %c0_i32 : i32, i32
  }
  func.func @transform_1(%arg0: i32) -> (i32, i32) {
    %c0_i32 = arith.constant 0 : i32
    %c0_i32_0 = arith.constant 0 : i32
    %c0_i32_1 = arith.constant 0 : i32
    return %c0_i32, %c0_i32_0 : i32, i32
  }
  func.func @transform_2(%arg0: i32) -> (i32, i32) {
    %c0_i32 = arith.constant 0 : i32
    %c0_i32_0 = arith.constant 0 : i32
    %c0_i32_1 = arith.constant 0 : i32
    return %c0_i32, %c0_i32_0 : i32, i32
  }
  func.func @transform_3(%arg0: i32) -> (i32, i32) {
    %c0_i32 = arith.constant 0 : i32
    %c0_i32_0 = arith.constant 0 : i32
    %c0_i32_1 = arith.constant 0 : i32
    return %c0_i32, %c0_i32_0 : i32, i32
  }
  func.func @transform_4(%arg0: i32) -> (i32, i32) {
    %c0_i32 = arith.constant 0 : i32
    %c0_i32_0 = arith.constant 0 : i32
    %c0_i32_1 = arith.constant 0 : i32
    return %c0_i32, %c0_i32_0 : i32, i32
  }
  func.func @transform_5(%arg0: i32) -> (i32, i32) {
    %c0_i32 = arith.constant 0 : i32
    %c0_i32_0 = arith.constant 0 : i32
    return %arg0, %c0_i32 : i32, i32
  }
}

</mosaic_0001>

<llo_original>
// kernel: tpu_custom_call.1
$region0: #{tpu_custom_call.1}
  #allocation0 [shape = 'u32[]', space=smem, size = 0x4, offset = 0x4, fixed_abs, tag = 'smem constant byte address 0x4 - core index']
  #allocation1 [shape = 'u32[144,128]{1,0:T(1,128)}', space=vmem, size = 0x12000, scoped, tag = 'internal scratch']
  %s0 = inlined_call_operand.hbm [shape: f32[8,192], index: 0, kind: input, shape index: {}]
  %s1 = inlined_call_operand.hbm [shape: bf16[192,2048], index: 1, kind: input, shape index: {}]
  %s2 = inlined_call_operand.hbm [shape: f32[1,2048], index: 2, kind: input, shape index: {}]
  %s3 = inlined_call_operand.hbm [shape: bf16[2048,128], index: 3, kind: input, shape index: {}]
  %s4 = inlined_call_operand.vmem [shape: f32[1,128], index: 4, kind: input, shape index: {}]
  %s5 = inlined_call_operand.hbm [shape: f32[8,128], index: 5, kind: output, shape index: {}]
  %s6 = sld [smem:[#allocation0]]
  $region46: #{tpu_custom_call.1} parent=0
    _
  %s8 = ssub.s32 1, %s6
  %s9 = scalar_select 0, %s8, %s6
  $region1: #{tpu_custom_call.1} parent=0
    #allocation2 [shape = 'u8[8192]{0}', space=vmem, size = 0x2000, scoped, tag = 'input window, operand 0, single buffered']
    #allocation3 [shape = 's32[1]{0}', space=sflag, size = 0x4, scoped, tag = 'scoped memory for tpu_custom_call.1']
    #allocation4 [shape = 's32[1]{0}', space=sflag, size = 0x4, scoped, tag = 'scoped memory for tpu_custom_call.1']
    #allocation5 [shape = 'u8[786432]{0}', space=vmem, size = 0xc0000, scoped, tag = 'input window, operand 1, single buffered']
    #allocation6 [shape = 's32[1]{0}', space=sflag, size = 0x4, scoped, tag = 'scoped memory for tpu_custom_call.1']
    #allocation7 [shape = 'u8[8192]{0}', space=vmem, size = 0x2000, scoped, tag = 'input window, operand 2, single buffered']
    #allocation8 [shape = 'u8[524288]{0}', space=vmem, size = 0x80000, scoped, tag = 'input window, operand 3, single buffered']
    #allocation9 [shape = 's32[1]{0}', space=sflag, size = 0x4, scoped, tag = 'scoped memory for tpu_custom_call.1']
    #allocation10 [shape = 'u8[4096]{0}', space=vmem, size = 0x1000, scoped, tag = 'output window, operand 0, single buffered']
    %10 = vsyncpa [#allocation3], 0
    %11 = vsyncpa [#allocation6], 0
    %12 = vsyncpa [#allocation9], 0
    %13 = vsyncpa [#allocation4], 0
    // Predicated region
    $region2: #{tpu_custom_call.1} parent=1 // pred_check
      _
    $region3: #{tpu_custom_call.1} parent=1 // pred_check_branch
      %15 = sbr.rel (0) target = $region5
    $region4: #{tpu_custom_call.1} parent=1 // pred_region
      %s17 = ssub.s32 256, 256
      %18 = vsyncadd [#allocation3], %s17
      %s20 = sshll.u32 [#allocation2], 4
      %s21 = int_to_ptr.vmem [resolvable:$true] %s20
      %23 = dma.hbm_to_vmem [thread:$0]  %s0, 256, %s21, [#allocation3]
    $region5: #{tpu_custom_call.1} parent=1 // pred_fallthru
      _
    // Predicated region
    $region6: #{tpu_custom_call.1} parent=1 // pred_check
      _
    $region7: #{tpu_custom_call.1} parent=1 // pred_check_branch
      %25 = sbr.rel (0) target = $region9
    $region8: #{tpu_custom_call.1} parent=1 // pred_region
      %s27 = ssub.s32 24576, 24576
      %28 = vsyncadd [#allocation6], %s27
      %s29 = sshll.u32 [#allocation5], 4
      %s30 = int_to_ptr.vmem [resolvable:$true] %s29
      %35 = dma.hbm_to_vmem [thread:$0]  %s1, 24576, %s30, [#allocation6], 1024, 1024, 64
    $region9: #{tpu_custom_call.1} parent=1 // pred_fallthru
      _
    // Predicated region
    $region10: #{tpu_custom_call.1} parent=1 // pred_check
      _
    $region11: #{tpu_custom_call.1} parent=1 // pred_check_branch
      %37 = sbr.rel (0) target = $region13
    $region12: #{tpu_custom_call.1} parent=1 // pred_region
      %s39 = ssub.s32 256, 256
      %40 = vsyncadd [#allocation6], %s39
      %s42 = sshll.u32 [#allocation7], 4
      %s43 = int_to_ptr.vmem [resolvable:$true] %s42
      %45 = dma.hbm_to_vmem [thread:$0]  %s2, 256, %s43, [#allocation6]
    $region13: #{tpu_custom_call.1} parent=1 // pred_fallthru
      _
    // Predicated region
    $region14: #{tpu_custom_call.1} parent=1 // pred_check
      _
    $region15: #{tpu_custom_call.1} parent=1 // pred_check_branch
      %47 = sbr.rel (0) target = $region17
    $region16: #{tpu_custom_call.1} parent=1 // pred_region
      %s49 = ssub.s32 16384, 16384
      %50 = vsyncadd [#allocation9], %s49
      %s51 = sshll.u32 [#allocation8], 4
      %s52 = int_to_ptr.vmem [resolvable:$true] %s51
      %57 = dma.hbm_to_vmem [thread:$0]  %s3, 16384, %s52, [#allocation9], 64, 64, 4
    $region17: #{tpu_custom_call.1} parent=1 // pred_fallthru
      _
    // Predicated region
    $region18: #{tpu_custom_call.1} parent=1 // pred_check
      _
    $region19: #{tpu_custom_call.1} parent=1 // pred_check_branch
      %59 = sbr.rel (0) target = $region21
    $region20: #{tpu_custom_call.1} parent=1 // pred_region
      _
    $region21: #{tpu_custom_call.1} parent=1 // pred_fallthru
      _
    // Predicated region
    $region22: #{tpu_custom_call.1} parent=1 // pred_check
      _
    $region23: #{tpu_custom_call.1} parent=1 // pred_check_branch
      %61 = sbr.rel (0) target = $region25
    $region24: #{tpu_custom_call.1} parent=1 // pred_region
      %62 = dma.done [#allocation3], 256
    $region25: #{tpu_custom_call.1} parent=1 // pred_fallthru
      _
    // Predicated region
    $region26: #{tpu_custom_call.1} parent=1 // pred_check
      _
    $region27: #{tpu_custom_call.1} parent=1 // pred_check_branch
      %64 = sbr.rel (0) target = $region29
    $region28: #{tpu_custom_call.1} parent=1 // pred_region
      %65 = dma.done [#allocation6], 24576
    $region29: #{tpu_custom_call.1} parent=1 // pred_fallthru
      _
    // Predicated region
    $region30: #{tpu_custom_call.1} parent=1 // pred_check
      _
    $region31: #{tpu_custom_call.1} parent=1 // pred_check_branch
      %67 = sbr.rel (0) target = $region33
    $region32: #{tpu_custom_call.1} parent=1 // pred_region
      %68 = dma.done [#allocation6], 256
    $region33: #{tpu_custom_call.1} parent=1 // pred_fallthru
      _
    // Predicated region
    $region34: #{tpu_custom_call.1} parent=1 // pred_check
      _
    $region35: #{tpu_custom_call.1} parent=1 // pred_check_branch
      %70 = sbr.rel (0) target = $region37
    $region36: #{tpu_custom_call.1} parent=1 // pred_region
      %71 = dma.done [#allocation9], 16384
    $region37: #{tpu_custom_call.1} parent=1 // pred_fallthru
      _
    %v73 = vld [vmem:[#allocation2] sm:$0xff]
    %v74 = vld [vmem:[#allocation2 + $0x8] sm:$0xff]
    %v75 = vpack.c.bf16 %v73, %v73
    %v76 = vpack.c.bf16 %v74, %v74
    %v77 = vld [vmem:[#allocation5] sm:$0xff]
    %v78 = vld [vmem:[#allocation5 + $0x8] sm:$0xff]
    %v79 = vld [vmem:[#allocation5 + $0x10] sm:$0xff]
    %v80 = vld [vmem:[#allocation5 + $0x18] sm:$0xff]
    %v81 = vld [vmem:[#allocation5 + $0x20] sm:$0xff]
    %v82 = vld [vmem:[#allocation5 + $0x28] sm:$0xff]
    %v83 = vld [vmem:[#allocation5 + $0x30] sm:$0xff]
    %v84 = vld [vmem:[#allocation5 + $0x38] sm:$0xff]
    %v85 = vld [vmem:[#allocation5 + $0x40] sm:$0xff]
    %v86 = vld [vmem:[#allocation5 + $0x48] sm:$0xff]
    %v87 = vld [vmem:[#allocation5 + $0x50] sm:$0xff]
    %v88 = vld [vmem:[#allocation5 + $0x58] sm:$0xff]
    %v89 = vld [vmem:[#allocation5 + $0x60] sm:$0xff]
    %v90 = vld [vmem:[#allocation5 + $0x68] sm:$0xff]
    %v91 = vld [vmem:[#allocation5 + $0x70] sm:$0xff]
    %v92 = vld [vmem:[#allocation5 + $0x78] sm:$0xff]
    %v93 = vld [vmem:[#allocation5 + $0x80] sm:$0xff]
    %v94 = vld [vmem:[#allocation5 + $0x88] sm:$0xff]
    %v95 = vld [vmem:[#allocation5 + $0x90] sm:$0xff]
    %v96 = vld [vmem:[#allocation5 + $0x98] sm:$0xff]
    %v97 = vld [vmem:[#allocation5 + $0xa0] sm:$0xff]
    %v98 = vld [vmem:[#allocation5 + $0xa8] sm:$0xff]
    %v99 = vld [vmem:[#allocation5 + $0xb0] sm:$0xff]
    %v100 = vld [vmem:[#allocation5 + $0xb8] sm:$0xff]
    %v101 = vld [vmem:[#allocation5 + $0xc0] sm:$0xff]
    %v102 = vld [vmem:[#allocation5 + $0xc8] sm:$0xff]
    %v103 = vld [vmem:[#allocation5 + $0xd0] sm:$0xff]
    %v104 = vld [vmem:[#allocation5 + $0xd8] sm:$0xff]
    %v105 = vld [vmem:[#allocation5 + $0xe0] sm:$0xff]
    %v106 = vld [vmem:[#allocation5 + $0xe8] sm:$0xff]
    %v107 = vld [vmem:[#allocation5 + $0xf0] sm:$0xff]
    %v108 = vld [vmem:[#allocation5 + $0xf8] sm:$0xff]
    %v109 = vld [vmem:[#allocation5 + $0x100] sm:$0xff]
    %v110 = vld [vmem:[#allocation5 + $0x108] sm:$0xff]
    %v111 = vld [vmem:[#allocation5 + $0x110] sm:$0xff]
    %v112 = vld [vmem:[#allocation5 + $0x118] sm:$0xff]
    %v113 = vld [vmem:[#allocation5 + $0x120] sm:$0xff]
    %v114 = vld [vmem:[#allocation5 + $0x128] sm:$0xff]
    %v115 = vld [vmem:[#allocation5 + $0x130] sm:$0xff]
    %v116 = vld [vmem:[#allocation5 + $0x138] sm:$0xff]
    %v117 = vld [vmem:[#allocation5 + $0x140] sm:$0xff]
    %v118 = vld [vmem:[#allocation5 + $0x148] sm:$0xff]
    %v119 = vld [vmem:[#allocation5 + $0x150] sm:$0xff]
    %v120 = vld [vmem:[#allocation5 + $0x158] sm:$0xff]
    %v121 = vld [vmem:[#allocation5 + $0x160] sm:$0xff]
    %v122 = vld [vmem:[#allocation5 + $0x168] sm:$0xff]
    %v123 = vld [vmem:[#allocation5 + $0x170] sm:$0xff]
    %v124 = vld [vmem:[#allocation5 + $0x178] sm:$0xff]
    %v125 = vld [vmem:[#allocation5 + $0x180] sm:$0xff]
    %v126 = vld [vmem:[#allocation5 + $0x188] sm:$0xff]
    %v127 = vld [vmem:[#allocation5 + $0x190] sm:$0xff]
    %v128 = vld [vmem:[#allocation5 + $0x198] sm:$0xff]
    %v129 = vld [vmem:[#allocation5 + $0x1a0] sm:$0xff]
    %v130 = vld [vmem:[#allocation5 + $0x1a8] sm:$0xff]
    %v131 = vld [vmem:[#allocation5 + $0x1b0] sm:$0xff]
    %v132 = vld [vmem:[#allocation5 + $0x1b8] sm:$0xff]
    %v133 = vld [vmem:[#allocation5 + $0x1c0] sm:$0xff]
    %v134 = vld [vmem:[#allocation5 + $0x1c8] sm:$0xff]
    %v135 = vld [vmem:[#allocation5 + $0x1d0] sm:$0xff]
    %v136 = vld [vmem:[#allocation5 + $0x1d8] sm:$0xff]
    %v137 = vld [vmem:[#allocation5 + $0x1e0] sm:$0xff]
    %v138 = vld [vmem:[#allocation5 + $0x1e8] sm:$0xff]
    %v139 = vld [vmem:[#allocation5 + $0x1f0] sm:$0xff]
    %v140 = vld [vmem:[#allocation5 + $0x1f8] sm:$0xff]
    %v141 = vld [vmem:[#allocation5 + $0x200] sm:$0xff]
    %v142 = vld [vmem:[#allocation5 + $0x208] sm:$0xff]
    %v143 = vld [vmem:[#allocation5 + $0x210] sm:$0xff]
    %v144 = vld [vmem:[#allocation5 + $0x218] sm:$0xff]
    %v145 = vld [vmem:[#allocation5 + $0x220] sm:$0xff]
    %v146 = vld [vmem:[#allocation5 + $0x228] sm:$0xff]
    %v147 = vld [vmem:[#allocation5 + $0x230] sm:$0xff]
    %v148 = vld [vmem:[#allocation5 + $0x238] sm:$0xff]
    %v149 = vld [vmem:[#allocation5 + $0x240] sm:$0xff]
    %v150 = vld [vmem:[#allocation5 + $0x248] sm:$0xff]
    %v151 = vld [vmem:[#allocation5 + $0x250] sm:$0xff]
    %v152 = vld [vmem:[#allocation5 + $0x258] sm:$0xff]
    %v153 = vld [vmem:[#allocation5 + $0x260] sm:$0xff]
    %v154 = vld [vmem:[#allocation5 + $0x268] sm:$0xff]
    %v155 = vld [vmem:[#allocation5 + $0x270] sm:$0xff]
    %v156 = vld [vmem:[#allocation5 + $0x278] sm:$0xff]
    %v157 = vld [vmem:[#allocation5 + $0x280] sm:$0xff]
    %v158 = vld [vmem:[#allocation5 + $0x288] sm:$0xff]
    %v159 = vld [vmem:[#allocation5 + $0x290] sm:$0xff]
    %v160 = vld [vmem:[#allocation5 + $0x298] sm:$0xff]
    %v161 = vld [vmem:[#allocation5 + $0x2a0] sm:$0xff]
    %v162 = vld [vmem:[#allocation5 + $0x2a8] sm:$0xff]
    %v163 = vld [vmem:[#allocation5 + $0x2b0] sm:$0xff]
    %v164 = vld [vmem:[#allocation5 + $0x2b8] sm:$0xff]
    %v165 = vld [vmem:[#allocation5 + $0x2c0] sm:$0xff]
    %v166 = vld [vmem:[#allocation5 + $0x2c8] sm:$0xff]
    %v167 = vld [vmem:[#allocation5 + $0x2d0] sm:$0xff]
    %v168 = vld [vmem:[#allocation5 + $0x2d8] sm:$0xff]
    %v169 = vld [vmem:[#allocation5 + $0x2e0] sm:$0xff]
    %v170 = vld [vmem:[#allocation5 + $0x2e8] sm:$0xff]
    %v171 = vld [vmem:[#allocation5 + $0x2f0] sm:$0xff]
    %v172 = vld [vmem:[#allocation5 + $0x2f8] sm:$0xff]
    %v173 = vld [vmem:[#allocation5 + $0x300] sm:$0xff]
    %v174 = vld [vmem:[#allocation5 + $0x308] sm:$0xff]
    %v175 = vld [vmem:[#allocation5 + $0x310] sm:$0xff]
    %v176 = vld [vmem:[#allocation5 + $0x318] sm:$0xff]
    %v177 = vld [vmem:[#allocation5 + $0x320] sm:$0xff]
    %v178 = vld [vmem:[#allocation5 + $0x328] sm:$0xff]
    %v179 = vld [vmem:[#allocation5 + $0x330] sm:$0xff]
    %v180 = vld [vmem:[#allocation5 + $0x338] sm:$0xff]
    %v181 = vld [vmem:[#allocation5 + $0x340] sm:$0xff]
    %v182 = vld [vmem:[#allocation5 + $0x348] sm:$0xff]
    %v183 = vld [vmem:[#allocation5 + $0x350] sm:$0xff]
    %v184 = vld [vmem:[#allocation5 + $0x358] sm:$0xff]
    %v185 = vld [vmem:[#allocation5 + $0x360] sm:$0xff]
    %v186 = vld [vmem:[#allocation5 + $0x368] sm:$0xff]
    %v187 = vld [vmem:[#allocation5 + $0x370] sm:$0xff]
    %v188 = vld [vmem:[#allocation5 + $0x378] sm:$0xff]
    %v189 = vld [vmem:[#allocation5 + $0x380] sm:$0xff]
    %v190 = vld [vmem:[#allocation5 + $0x388] sm:$0xff]
    %v191 = vld [vmem:[#allocation5 + $0x390] sm:$0xff]
    %v192 = vld [vmem:[#allocation5 + $0x398] sm:$0xff]
    %v193 = vld [vmem:[#allocation5 + $0x3a0] sm:$0xff]
    %v194 = vld [vmem:[#allocation5 + $0x3a8] sm:$0xff]
    %v195 = vld [vmem:[#allocation5 + $0x3b0] sm:$0xff]
    %v196 = vld [vmem:[#allocation5 + $0x3b8] sm:$0xff]
    %v197 = vld [vmem:[#allocation5 + $0x3c0] sm:$0xff]
    %v198 = vld [vmem:[#allocation5 + $0x3c8] sm:$0xff]
    %v199 = vld [vmem:[#allocation5 + $0x3d0] sm:$0xff]
    %v200 = vld [vmem:[#allocation5 + $0x3d8] sm:$0xff]
    %v201 = vld [vmem:[#allocation5 + $0x3e0] sm:$0xff]
    %v202 = vld [vmem:[#allocation5 + $0x3e8] sm:$0xff]
    %v203 = vld [vmem:[#allocation5 + $0x3f0] sm:$0xff]
    %v204 = vld [vmem:[#allocation5 + $0x3f8] sm:$0xff]
    %v205 = vld [vmem:[#allocation5 + $0x400] sm:$0xff]
    %v206 = vld [vmem:[#allocation5 + $0x408] sm:$0xff]
    %v207 = vld [vmem:[#allocation5 + $0x410] sm:$0xff]
    %v208 = vld [vmem:[#allocation5 + $0x418] sm:$0xff]
    %v209 = vld [vmem:[#allocation5 + $0x420] sm:$0xff]
    %v210 = vld [vmem:[#allocation5 + $0x428] sm:$0xff]
    %v211 = vld [vmem:[#allocation5 + $0x430] sm:$0xff]
    %v212 = vld [vmem:[#allocation5 + $0x438] sm:$0xff]
    %v213 = vld [vmem:[#allocation5 + $0x440] sm:$0xff]
    %v214 = vld [vmem:[#allocation5 + $0x448] sm:$0xff]
    %v215 = vld [vmem:[#allocation5 + $0x450] sm:$0xff]
    %v216 = vld [vmem:[#allocation5 + $0x458] sm:$0xff]
    %v217 = vld [vmem:[#allocation5 + $0x460] sm:$0xff]
    %v218 = vld [vmem:[#allocation5 + $0x468] sm:$0xff]
    %v219 = vld [vmem:[#allocation5 + $0x470] sm:$0xff]
    %v220 = vld [vmem:[#allocation5 + $0x478] sm:$0xff]
    %v221 = vld [vmem:[#allocation5 + $0x480] sm:$0xff]
    %v222 = vld [vmem:[#allocation5 + $0x488] sm:$0xff]
    %v223 = vld [vmem:[#allocation5 + $0x490] sm:$0xff]
    %v224 = vld [vmem:[#allocation5 + $0x498] sm:$0xff]
    %v225 = vld [vmem:[#allocation5 + $0x4a0] sm:$0xff]
    %v226 = vld [vmem:[#allocation5 + $0x4a8] sm:$0xff]
    %v227 = vld [vmem:[#allocation5 + $0x4b0] sm:$0xff]
    %v228 = vld [vmem:[#allocation5 + $0x4b8] sm:$0xff]
    %v229 = vld [vmem:[#allocation5 + $0x4c0] sm:$0xff]
    %v230 = vld [vmem:[#allocation5 + $0x4c8] sm:$0xff]
    %v231 = vld [vmem:[#allocation5 + $0x4d0] sm:$0xff]
    %v232 = vld [vmem:[#allocation5 + $0x4d8] sm:$0xff]
    %v233 = vld [vmem:[#allocation5 + $0x4e0] sm:$0xff]
    %v234 = vld [vmem:[#allocation5 + $0x4e8] sm:$0xff]
    %v235 = vld [vmem:[#allocation5 + $0x4f0] sm:$0xff]
    %v236 = vld [vmem:[#allocation5 + $0x4f8] sm:$0xff]
    %v237 = vld [vmem:[#allocation5 + $0x500] sm:$0xff]
    %v238 = vld [vmem:[#allocation5 + $0x508] sm:$0xff]
    %v239 = vld [vmem:[#allocation5 + $0x510] sm:$0xff]
    %v240 = vld [vmem:[#allocation5 + $0x518] sm:$0xff]
    %v241 = vld [vmem:[#allocation5 + $0x520] sm:$0xff]
    %v242 = vld [vmem:[#allocation5 + $0x528] sm:$0xff]
    %v243 = vld [vmem:[#allocation5 + $0x530] sm:$0xff]
    %v244 = vld [vmem:[#allocation5 + $0x538] sm:$0xff]
    %v245 = vld [vmem:[#allocation5 + $0x540] sm:$0xff]
    %v246 = vld [vmem:[#allocation5 + $0x548] sm:$0xff]
    %v247 = vld [vmem:[#allocation5 + $0x550] sm:$0xff]
    %v248 = vld [vmem:[#allocation5 + $0x558] sm:$0xff]
    %v249 = vld [vmem:[#allocation5 + $0x560] sm:$0xff]
    %v250 = vld [vmem:[#allocation5 + $0x568] sm:$0xff]
    %v251 = vld [vmem:[#allocation5 + $0x570] sm:$0xff]
    %v252 = vld [vmem:[#allocation5 + $0x578] sm:$0xff]
    %v253 = vld [vmem:[#allocation5 + $0x580] sm:$0xff]
    %v254 = vld [vmem:[#allocation5 + $0x588] sm:$0xff]
    %v255 = vld [vmem:[#allocation5 + $0x590] sm:$0xff]
    %v256 = vld [vmem:[#allocation5 + $0x598] sm:$0xff]
    %v257 = vld [vmem:[#allocation5 + $0x5a0] sm:$0xff]
    %v258 = vld [vmem:[#allocation5 + $0x5a8] sm:$0xff]
    %v259 = vld [vmem:[#allocation5 + $0x5b0] sm:$0xff]
    %v260 = vld [vmem:[#allocation5 + $0x5b8] sm:$0xff]
    %v261 = vld [vmem:[#allocation5 + $0x5c0] sm:$0xff]
    %v262 = vld [vmem:[#allocation5 + $0x5c8] sm:$0xff]
    %v263 = vld [vmem:[#allocation5 + $0x5d0] sm:$0xff]
    %v264 = vld [vmem:[#allocation5 + $0x5d8] sm:$0xff]
    %v265 = vld [vmem:[#allocation5 + $0x5e0] sm:$0xff]
    %v266 = vld [vmem:[#allocation5 + $0x5e8] sm:$0xff]
    %v267 = vld [vmem:[#allocation5 + $0x5f0] sm:$0xff]
    %v268 = vld [vmem:[#allocation5 + $0x5f8] sm:$0xff]
    %v269 = vld [vmem:[#allocation7] sm:$0xff]
    %v270 = vld [vmem:[#allocation7 + $0x8] sm:$0xff]
    %v273 = vlaneseq
    %v274 = vshrl.u32 %v273, 7
    %v275 = vsub.s32 0, %v274
    %v276 = vrot.slane %v269, %v275
    %v277 = vlaneseq
    %v278 = vshrl.u32 %v277, 7
    %v279 = vsub.s32 1, %v278
    %v280 = vrot.slane %v269, %v279
    %v281 = vlaneseq
    %v282 = vshrl.u32 %v281, 7
    %v283 = vsub.s32 2, %v282
    %v284 = vrot.slane %v269, %v283
    %v285 = vlaneseq
    %v286 = vshrl.u32 %v285, 7
    %v287 = vsub.s32 3, %v286
    %v288 = vrot.slane %v269, %v287
    %v289 = vlaneseq
    %v290 = vshrl.u32 %v289, 7
    %v291 = vsub.s32 4, %v290
    %v292 = vrot.slane %v269, %v291
    %v293 = vlaneseq
    %v294 = vshrl.u32 %v293, 7
    %v295 = vsub.s32 5, %v294
    %v296 = vrot.slane %v269, %v295
    %v297 = vlaneseq
    %v298 = vshrl.u32 %v297, 7
    %v299 = vsub.s32 6, %v298
    %v300 = vrot.slane %v269, %v299
    %v301 = vlaneseq
    %v302 = vshrl.u32 %v301, 7
    %v303 = vsub.s32 7, %v302
    %v304 = vrot.slane %v269, %v303
    %v305 = vlaneseq
    %v306 = vshrl.u32 %v305, 7
    %v307 = vsub.s32 0, %v306
    %v308 = vrot.slane %v270, %v307
    %v309 = vlaneseq
    %v310 = vshrl.u32 %v309, 7
    %v311 = vsub.s32 1, %v310
    %v312 = vrot.slane %v270, %v311
    %v313 = vlaneseq
    %v314 = vshrl.u32 %v313, 7
    %v315 = vsub.s32 2, %v314
    %v316 = vrot.slane %v270, %v315
    %v317 = vlaneseq
    %v318 = vshrl.u32 %v317, 7
    %v319 = vsub.s32 3, %v318
    %v320 = vrot.slane %v270, %v319
    %v321 = vlaneseq
    %v322 = vshrl.u32 %v321, 7
    %v323 = vsub.s32 4, %v322
    %v324 = vrot.slane %v270, %v323
    %v325 = vlaneseq
    %v326 = vshrl.u32 %v325, 7
    %v327 = vsub.s32 5, %v326
    %v328 = vrot.slane %v270, %v327
    %v329 = vlaneseq
    %v330 = vshrl.u32 %v329, 7
    %v331 = vsub.s32 6, %v330
    %v332 = vrot.slane %v270, %v331
    %v333 = vlaneseq
    %v334 = vshrl.u32 %v333, 7
    %v335 = vsub.s32 7, %v334
    %v336 = vrot.slane %v270, %v335
    %v545 = vunpack.c.l.b16 %v77
    %v546 = vunpack.c.h.b16 %v77
    %v547 = vunpack.c.l.b16 %v78
    %v548 = vunpack.c.h.b16 %v78
    %v549 = vunpack.c.l.b16 %v79
    %v550 = vunpack.c.h.b16 %v79
    %v551 = vunpack.c.l.b16 %v80
    %v552 = vunpack.c.h.b16 %v80
    %v553 = vunpack.c.l.b16 %v81
    %v554 = vunpack.c.h.b16 %v81
    %v555 = vunpack.c.l.b16 %v82
    %v556 = vunpack.c.h.b16 %v82
    %v557 = vunpack.c.l.b16 %v83
    %v558 = vunpack.c.h.b16 %v83
    %v559 = vunpack.c.l.b16 %v84
    %v560 = vunpack.c.h.b16 %v84
    %v561 = vunpack.c.l.b16 %v85
    %v562 = vunpack.c.h.b16 %v85
    %v563 = vunpack.c.l.b16 %v86
    %v564 = vunpack.c.h.b16 %v86
    %v565 = vunpack.c.l.b16 %v87
    %v566 = vunpack.c.h.b16 %v87
    %v567 = vunpack.c.l.b16 %v88
    %v568 = vunpack.c.h.b16 %v88
    %v569 = vunpack.c.l.b16 %v89
    %v570 = vunpack.c.h.b16 %v89
    %v571 = vunpack.c.l.b16 %v90
    %v572 = vunpack.c.h.b16 %v90
    %v573 = vunpack.c.l.b16 %v91
    %v574 = vunpack.c.h.b16 %v91
    %v575 = vunpack.c.l.b16 %v92
    %v576 = vunpack.c.h.b16 %v92
    %v577 = vunpack.c.l.b16 %v93
    %v578 = vunpack.c.h.b16 %v93
    %v579 = vunpack.c.l.b16 %v94
    %v580 = vunpack.c.h.b16 %v94
    %v581 = vunpack.c.l.b16 %v95
    %v582 = vunpack.c.h.b16 %v95
    %v583 = vunpack.c.l.b16 %v96
    %v584 = vunpack.c.h.b16 %v96
    %v585 = vunpack.c.l.b16 %v97
    %v586 = vunpack.c.h.b16 %v97
    %v587 = vunpack.c.l.b16 %v98
    %v588 = vunpack.c.h.b16 %v98
    %v589 = vunpack.c.l.b16 %v99
    %v590 = vunpack.c.h.b16 %v99
    %v591 = vunpack.c.l.b16 %v100
    %v592 = vunpack.c.h.b16 %v100
    %v593 = vunpack.c.l.b16 %v101
    %v594 = vunpack.c.h.b16 %v101
    %v595 = vunpack.c.l.b16 %v102
    %v596 = vunpack.c.h.b16 %v102
    %v597 = vunpack.c.l.b16 %v103
    %v598 = vunpack.c.h.b16 %v103
    %v599 = vunpack.c.l.b16 %v104
    %v600 = vunpack.c.h.b16 %v104
    %v601 = vunpack.c.l.b16 %v105
    %v602 = vunpack.c.h.b16 %v105
    %v603 = vunpack.c.l.b16 %v106
    %v604 = vunpack.c.h.b16 %v106
    %v605 = vunpack.c.l.b16 %v107
    %v606 = vunpack.c.h.b16 %v107
    %v607 = vunpack.c.l.b16 %v108
    %v608 = vunpack.c.h.b16 %v108
    %v609 = vunpack.c.l.b16 %v109
    %v610 = vunpack.c.h.b16 %v109
    %v611 = vunpack.c.l.b16 %v110
    %v612 = vunpack.c.h.b16 %v110
    %v613 = vunpack.c.l.b16 %v111
    %v614 = vunpack.c.h.b16 %v111
    %v615 = vunpack.c.l.b16 %v112
    %v616 = vunpack.c.h.b16 %v112
    %v617 = vunpack.c.l.b16 %v113
    %v618 = vunpack.c.h.b16 %v113
    %v619 = vunpack.c.l.b16 %v114
    %v620 = vunpack.c.h.b16 %v114
    %v621 = vunpack.c.l.b16 %v115
    %v622 = vunpack.c.h.b16 %v115
    %v623 = vunpack.c.l.b16 %v116
    %v624 = vunpack.c.h.b16 %v116
    %v625 = vunpack.c.l.b16 %v117
    %v626 = vunpack.c.h.b16 %v117
    %v627 = vunpack.c.l.b16 %v118
    %v628 = vunpack.c.h.b16 %v118
    %v629 = vunpack.c.l.b16 %v119
    %v630 = vunpack.c.h.b16 %v119
    %v631 = vunpack.c.l.b16 %v120
    %v632 = vunpack.c.h.b16 %v120
    %v633 = vunpack.c.l.b16 %v121
    %v634 = vunpack.c.h.b16 %v121
    %v635 = vunpack.c.l.b16 %v122
    %v636 = vunpack.c.h.b16 %v122
    %v637 = vunpack.c.l.b16 %v123
    %v638 = vunpack.c.h.b16 %v123
    %v639 = vunpack.c.l.b16 %v124
    %v640 = vunpack.c.h.b16 %v124
    %v641 = vunpack.c.l.b16 %v125
    %v642 = vunpack.c.h.b16 %v125
    %v643 = vunpack.c.l.b16 %v126
    %v644 = vunpack.c.h.b16 %v126
    %v645 = vunpack.c.l.b16 %v127
    %v646 = vunpack.c.h.b16 %v127
    %v647 = vunpack.c.l.b16 %v128
    %v648 = vunpack.c.h.b16 %v128
    %v649 = vunpack.c.l.b16 %v129
    %v650 = vunpack.c.h.b16 %v129
    %v651 = vunpack.c.l.b16 %v130
    %v652 = vunpack.c.h.b16 %v130
    %v653 = vunpack.c.l.b16 %v131
    %v654 = vunpack.c.h.b16 %v131
    %v655 = vunpack.c.l.b16 %v132
    %v656 = vunpack.c.h.b16 %v132
    %v657 = vunpack.c.l.b16 %v133
    %v658 = vunpack.c.h.b16 %v133
    %v659 = vunpack.c.l.b16 %v134
    %v660 = vunpack.c.h.b16 %v134
    %v661 = vunpack.c.l.b16 %v135
    %v662 = vunpack.c.h.b16 %v135
    %v663 = vunpack.c.l.b16 %v136
    %v664 = vunpack.c.h.b16 %v136
    %v665 = vunpack.c.l.b16 %v137
    %v666 = vunpack.c.h.b16 %v137
    %v667 = vunpack.c.l.b16 %v138
    %v668 = vunpack.c.h.b16 %v138
    %v669 = vunpack.c.l.b16 %v139
    %v670 = vunpack.c.h.b16 %v139
    %v671 = vunpack.c.l.b16 %v140
    %v672 = vunpack.c.h.b16 %v140
    %v673 = vunpack.c.l.b16 %v141
    %v674 = vunpack.c.h.b16 %v141
    %v675 = vunpack.c.l.b16 %v142
    %v676 = vunpack.c.h.b16 %v142
    %v677 = vunpack.c.l.b16 %v143
    %v678 = vunpack.c.h.b16 %v143
    %v679 = vunpack.c.l.b16 %v144
    %v680 = vunpack.c.h.b16 %v144
    %v681 = vunpack.c.l.b16 %v145
    %v682 = vunpack.c.h.b16 %v145
    %v683 = vunpack.c.l.b16 %v146
    %v684 = vunpack.c.h.b16 %v146
    %v685 = vunpack.c.l.b16 %v147
    %v686 = vunpack.c.h.b16 %v147
    %v687 = vunpack.c.l.b16 %v148
    %v688 = vunpack.c.h.b16 %v148
    %v689 = vunpack.c.l.b16 %v149
    %v690 = vunpack.c.h.b16 %v149
    %v691 = vunpack.c.l.b16 %v150
    %v692 = vunpack.c.h.b16 %v150
    %v693 = vunpack.c.l.b16 %v151
    %v694 = vunpack.c.h.b16 %v151
    %v695 = vunpack.c.l.b16 %v152
    %v696 = vunpack.c.h.b16 %v152
    %v697 = vunpack.c.l.b16 %v153
    %v698 = vunpack.c.h.b16 %v153
    %v699 = vunpack.c.l.b16 %v154
    %v700 = vunpack.c.h.b16 %v154
    %v701 = vunpack.c.l.b16 %v155
    %v702 = vunpack.c.h.b16 %v155
    %v703 = vunpack.c.l.b16 %v156
    %v704 = vunpack.c.h.b16 %v156
    %v705 = vunpack.c.l.b16 %v157
    %v706 = vunpack.c.h.b16 %v157
    %v707 = vunpack.c.l.b16 %v158
    %v708 = vunpack.c.h.b16 %v158
    %v709 = vunpack.c.l.b16 %v159
    %v710 = vunpack.c.h.b16 %v159
    %v711 = vunpack.c.l.b16 %v160
    %v712 = vunpack.c.h.b16 %v160
    %v713 = vunpack.c.l.b16 %v161
    %v714 = vunpack.c.h.b16 %v161
    %v715 = vunpack.c.l.b16 %v162
    %v716 = vunpack.c.h.b16 %v162
    %v717 = vunpack.c.l.b16 %v163
    %v718 = vunpack.c.h.b16 %v163
    %v719 = vunpack.c.l.b16 %v164
    %v720 = vunpack.c.h.b16 %v164
    %v721 = vunpack.c.l.b16 %v165
    %v722 = vunpack.c.h.b16 %v165
    %v723 = vunpack.c.l.b16 %v166
    %v724 = vunpack.c.h.b16 %v166
    %v725 = vunpack.c.l.b16 %v167
    %v726 = vunpack.c.h.b16 %v167
    %v727 = vunpack.c.l.b16 %v168
    %v728 = vunpack.c.h.b16 %v168
    %v729 = vunpack.c.l.b16 %v169
    %v730 = vunpack.c.h.b16 %v169
    %v731 = vunpack.c.l.b16 %v170
    %v732 = vunpack.c.h.b16 %v170
    %v733 = vunpack.c.l.b16 %v171
    %v734 = vunpack.c.h.b16 %v171
    %v735 = vunpack.c.l.b16 %v172
    %v736 = vunpack.c.h.b16 %v172
    %v737 = vunpack.c.l.b16 %v173
    %v738 = vunpack.c.h.b16 %v173
    %v739 = vunpack.c.l.b16 %v174
    %v740 = vunpack.c.h.b16 %v174
    %v741 = vunpack.c.l.b16 %v175
    %v742 = vunpack.c.h.b16 %v175
    %v743 = vunpack.c.l.b16 %v176
    %v744 = vunpack.c.h.b16 %v176
    %v745 = vunpack.c.l.b16 %v177
    %v746 = vunpack.c.h.b16 %v177
    %v747 = vunpack.c.l.b16 %v178
    %v748 = vunpack.c.h.b16 %v178
    %v749 = vunpack.c.l.b16 %v179
    %v750 = vunpack.c.h.b16 %v179
    %v751 = vunpack.c.l.b16 %v180
    %v752 = vunpack.c.h.b16 %v180
    %v753 = vunpack.c.l.b16 %v181
    %v754 = vunpack.c.h.b16 %v181
    %v755 = vunpack.c.l.b16 %v182
    %v756 = vunpack.c.h.b16 %v182
    %v757 = vunpack.c.l.b16 %v183
    %v758 = vunpack.c.h.b16 %v183
    %v759 = vunpack.c.l.b16 %v184
    %v760 = vunpack.c.h.b16 %v184
    %v761 = vunpack.c.l.b16 %v185
    %v762 = vunpack.c.h.b16 %v185
    %v763 = vunpack.c.l.b16 %v186
    %v764 = vunpack.c.h.b16 %v186
    %v765 = vunpack.c.l.b16 %v187
    %v766 = vunpack.c.h.b16 %v187
    %v767 = vunpack.c.l.b16 %v188
    %v768 = vunpack.c.h.b16 %v188
    %v769 = vunpack.c.l.b16 %v189
    %v770 = vunpack.c.h.b16 %v189
    %v771 = vunpack.c.l.b16 %v190
    %v772 = vunpack.c.h.b16 %v190
    %v773 = vunpack.c.l.b16 %v191
    %v774 = vunpack.c.h.b16 %v191
    %v775 = vunpack.c.l.b16 %v192
    %v776 = vunpack.c.h.b16 %v192
    %v777 = vunpack.c.l.b16 %v193
    %v778 = vunpack.c.h.b16 %v193
    %v779 = vunpack.c.l.b16 %v194
    %v780 = vunpack.c.h.b16 %v194
    %v781 = vunpack.c.l.b16 %v195
    %v782 = vunpack.c.h.b16 %v195
    %v783 = vunpack.c.l.b16 %v196
    %v784 = vunpack.c.h.b16 %v196
    %v785 = vunpack.c.l.b16 %v197
    %v786 = vunpack.c.h.b16 %v197
    %v787 = vunpack.c.l.b16 %v198
    %v788 = vunpack.c.h.b16 %v198
    %v789 = vunpack.c.l.b16 %v199
    %v790 = vunpack.c.h.b16 %v199
    %v791 = vunpack.c.l.b16 %v200
    %v792 = vunpack.c.h.b16 %v200
    %v793 = vunpack.c.l.b16 %v201
    %v794 = vunpack.c.h.b16 %v201
    %v795 = vunpack.c.l.b16 %v202
    %v796 = vunpack.c.h.b16 %v202
    %v797 = vunpack.c.l.b16 %v203
    %v798 = vunpack.c.h.b16 %v203
    %v799 = vunpack.c.l.b16 %v204
    %v800 = vunpack.c.h.b16 %v204
    %v801 = vunpack.c.l.b16 %v205
    %v802 = vunpack.c.h.b16 %v205
    %v803 = vunpack.c.l.b16 %v206
    %v804 = vunpack.c.h.b16 %v206
    %v805 = vunpack.c.l.b16 %v207
    %v806 = vunpack.c.h.b16 %v207
    %v807 = vunpack.c.l.b16 %v208
    %v808 = vunpack.c.h.b16 %v208
    %v809 = vunpack.c.l.b16 %v209
    %v810 = vunpack.c.h.b16 %v209
    %v811 = vunpack.c.l.b16 %v210
    %v812 = vunpack.c.h.b16 %v210
    %v813 = vunpack.c.l.b16 %v211
    %v814 = vunpack.c.h.b16 %v211
    %v815 = vunpack.c.l.b16 %v212
    %v816 = vunpack.c.h.b16 %v212
    %v817 = vunpack.c.l.b16 %v213
    %v818 = vunpack.c.h.b16 %v213
    %v819 = vunpack.c.l.b16 %v214
    %v820 = vunpack.c.h.b16 %v214
    %v821 = vunpack.c.l.b16 %v215
    %v822 = vunpack.c.h.b16 %v215
    %v823 = vunpack.c.l.b16 %v216
    %v824 = vunpack.c.h.b16 %v216
    %v825 = vunpack.c.l.b16 %v217
    %v826 = vunpack.c.h.b16 %v217
    %v827 = vunpack.c.l.b16 %v218
    %v828 = vunpack.c.h.b16 %v218
    %v829 = vunpack.c.l.b16 %v219
    %v830 = vunpack.c.h.b16 %v219
    %v831 = vunpack.c.l.b16 %v220
    %v832 = vunpack.c.h.b16 %v220
    %v833 = vunpack.c.l.b16 %v221
    %v834 = vunpack.c.h.b16 %v221
    %v835 = vunpack.c.l.b16 %v222
    %v836 = vunpack.c.h.b16 %v222
    %v837 = vunpack.c.l.b16 %v223
    %v838 = vunpack.c.h.b16 %v223
    %v839 = vunpack.c.l.b16 %v224
    %v840 = vunpack.c.h.b16 %v224
    %v841 = vunpack.c.l.b16 %v225
    %v842 = vunpack.c.h.b16 %v225
    %v843 = vunpack.c.l.b16 %v226
    %v844 = vunpack.c.h.b16 %v226
    %v845 = vunpack.c.l.b16 %v227
    %v846 = vunpack.c.h.b16 %v227
    %v847 = vunpack.c.l.b16 %v228
    %v848 = vunpack.c.h.b16 %v228
    %v849 = vunpack.c.l.b16 %v229
    %v850 = vunpack.c.h.b16 %v229
    %v851 = vunpack.c.l.b16 %v230
    %v852 = vunpack.c.h.b16 %v230
    %v853 = vunpack.c.l.b16 %v231
    %v854 = vunpack.c.h.b16 %v231
    %v855 = vunpack.c.l.b16 %v232
    %v856 = vunpack.c.h.b16 %v232
    %v857 = vunpack.c.l.b16 %v233
    %v858 = vunpack.c.h.b16 %v233
    %v859 = vunpack.c.l.b16 %v234
    %v860 = vunpack.c.h.b16 %v234
    %v861 = vunpack.c.l.b16 %v235
    %v862 = vunpack.c.h.b16 %v235
    %v863 = vunpack.c.l.b16 %v236
    %v864 = vunpack.c.h.b16 %v236
    %v865 = vunpack.c.l.b16 %v237
    %v866 = vunpack.c.h.b16 %v237
    %v867 = vunpack.c.l.b16 %v238
    %v868 = vunpack.c.h.b16 %v238
    %v869 = vunpack.c.l.b16 %v239
    %v870 = vunpack.c.h.b16 %v239
    %v871 = vunpack.c.l.b16 %v240
    %v872 = vunpack.c.h.b16 %v240
    %v873 = vunpack.c.l.b16 %v241
    %v874 = vunpack.c.h.b16 %v241
    %v875 = vunpack.c.l.b16 %v242
    %v876 = vunpack.c.h.b16 %v242
    %v877 = vunpack.c.l.b16 %v243
    %v878 = vunpack.c.h.b16 %v243
    %v879 = vunpack.c.l.b16 %v244
    %v880 = vunpack.c.h.b16 %v244
    %v881 = vunpack.c.l.b16 %v245
    %v882 = vunpack.c.h.b16 %v245
    %v883 = vunpack.c.l.b16 %v246
    %v884 = vunpack.c.h.b16 %v246
    %v885 = vunpack.c.l.b16 %v247
    %v886 = vunpack.c.h.b16 %v247
    %v887 = vunpack.c.l.b16 %v248
    %v888 = vunpack.c.h.b16 %v248
    %v889 = vunpack.c.l.b16 %v249
    %v890 = vunpack.c.h.b16 %v249
    %v891 = vunpack.c.l.b16 %v250
    %v892 = vunpack.c.h.b16 %v250
    %v893 = vunpack.c.l.b16 %v251
    %v894 = vunpack.c.h.b16 %v251
    %v895 = vunpack.c.l.b16 %v252
    %v896 = vunpack.c.h.b16 %v252
    %v897 = vunpack.c.l.b16 %v253
    %v898 = vunpack.c.h.b16 %v253
    %v899 = vunpack.c.l.b16 %v254
    %v900 = vunpack.c.h.b16 %v254
    %v901 = vunpack.c.l.b16 %v255
    %v902 = vunpack.c.h.b16 %v255
    %v903 = vunpack.c.l.b16 %v256
    %v904 = vunpack.c.h.b16 %v256
    %v905 = vunpack.c.l.b16 %v257
    %v906 = vunpack.c.h.b16 %v257
    %v907 = vunpack.c.l.b16 %v258
    %v908 = vunpack.c.h.b16 %v258
    %v909 = vunpack.c.l.b16 %v259
    %v910 = vunpack.c.h.b16 %v259
    %v911 = vunpack.c.l.b16 %v260
    %v912 = vunpack.c.h.b16 %v260
    %v913 = vunpack.c.l.b16 %v261
    %v914 = vunpack.c.h.b16 %v261
    %v915 = vunpack.c.l.b16 %v262
    %v916 = vunpack.c.h.b16 %v262
    %v917 = vunpack.c.l.b16 %v263
    %v918 = vunpack.c.h.b16 %v263
    %v919 = vunpack.c.l.b16 %v264
    %v920 = vunpack.c.h.b16 %v264
    %v921 = vunpack.c.l.b16 %v265
    %v922 = vunpack.c.h.b16 %v265
    %v923 = vunpack.c.l.b16 %v266
    %v924 = vunpack.c.h.b16 %v266
    %v925 = vunpack.c.l.b16 %v267
    %v926 = vunpack.c.h.b16 %v267
    %v927 = vunpack.c.l.b16 %v268
    %v928 = vunpack.c.h.b16 %v268
    %v929 = vpack.c.b16 %v561, %v545
    %v930 = vpack.c.b16 %v562, %v546
    %v931 = vpack.c.b16 %v563, %v547
    %v932 = vpack.c.b16 %v564, %v548
    %v933 = vpack.c.b16 %v565, %v549
    %v934 = vpack.c.b16 %v566, %v550
    %v935 = vpack.c.b16 %v567, %v551
    %v936 = vpack.c.b16 %v568, %v552
    %v937 = vpack.c.b16 %v569, %v553
    %v938 = vpack.c.b16 %v570, %v554
    %v939 = vpack.c.b16 %v571, %v555
    %v940 = vpack.c.b16 %v572, %v556
    %v941 = vpack.c.b16 %v573, %v557
    %v942 = vpack.c.b16 %v574, %v558
    %v943 = vpack.c.b16 %v575, %v559
    %v944 = vpack.c.b16 %v576, %v560
    %v945 = vpack.c.b16 %v593, %v577
    %v946 = vpack.c.b16 %v594, %v578
    %v947 = vpack.c.b16 %v595, %v579
    %v948 = vpack.c.b16 %v596, %v580
    %v949 = vpack.c.b16 %v597, %v581
    %v950 = vpack.c.b16 %v598, %v582
    %v951 = vpack.c.b16 %v599, %v583
    %v952 = vpack.c.b16 %v600, %v584
    %v953 = vpack.c.b16 %v601, %v585
    %v954 = vpack.c.b16 %v602, %v586
    %v955 = vpack.c.b16 %v603, %v587
    %v956 = vpack.c.b16 %v604, %v588
    %v957 = vpack.c.b16 %v605, %v589
    %v958 = vpack.c.b16 %v606, %v590
    %v959 = vpack.c.b16 %v607, %v591
    %v960 = vpack.c.b16 %v608, %v592
    %v961 = vpack.c.b16 %v625, %v609
    %v962 = vpack.c.b16 %v626, %v610
    %v963 = vpack.c.b16 %v627, %v611
    %v964 = vpack.c.b16 %v628, %v612
    %v965 = vpack.c.b16 %v629, %v613
    %v966 = vpack.c.b16 %v630, %v614
    %v967 = vpack.c.b16 %v631, %v615
    %v968 = vpack.c.b16 %v632, %v616
    %v969 = vpack.c.b16 %v633, %v617
    %v970 = vpack.c.b16 %v634, %v618
    %v971 = vpack.c.b16 %v635, %v619
    %v972 = vpack.c.b16 %v636, %v620
    %v973 = vpack.c.b16 %v637, %v621
    %v974 = vpack.c.b16 %v638, %v622
    %v975 = vpack.c.b16 %v639, %v623
    %v976 = vpack.c.b16 %v640, %v624
    %v977 = vpack.c.b16 %v657, %v641
    %v978 = vpack.c.b16 %v658, %v642
    %v979 = vpack.c.b16 %v659, %v643
    %v980 = vpack.c.b16 %v660, %v644
    %v981 = vpack.c.b16 %v661, %v645
    %v982 = vpack.c.b16 %v662, %v646
    %v983 = vpack.c.b16 %v663, %v647
    %v984 = vpack.c.b16 %v664, %v648
    %v985 = vpack.c.b16 %v665, %v649
    %v986 = vpack.c.b16 %v666, %v650
    %v987 = vpack.c.b16 %v667, %v651
    %v988 = vpack.c.b16 %v668, %v652
    %v989 = vpack.c.b16 %v669, %v653
    %v990 = vpack.c.b16 %v670, %v654
    %v991 = vpack.c.b16 %v671, %v655
    %v992 = vpack.c.b16 %v672, %v656
    %v993 = vpack.c.b16 %v689, %v673
    %v994 = vpack.c.b16 %v690, %v674
    %v995 = vpack.c.b16 %v691, %v675
    %v996 = vpack.c.b16 %v692, %v676
    %v997 = vpack.c.b16 %v693, %v677
    %v998 = vpack.c.b16 %v694, %v678
    %v999 = vpack.c.b16 %v695, %v679
    %v1000 = vpack.c.b16 %v696, %v680
    %v1001 = vpack.c.b16 %v697, %v681
    %v1002 = vpack.c.b16 %v698, %v682
    %v1003 = vpack.c.b16 %v699, %v683
    %v1004 = vpack.c.b16 %v700, %v684
    %v1005 = vpack.c.b16 %v701, %v685
    %v1006 = vpack.c.b16 %v702, %v686
    %v1007 = vpack.c.b16 %v703, %v687
    %v1008 = vpack.c.b16 %v704, %v688
    %v1009 = vpack.c.b16 %v721, %v705
    %v1010 = vpack.c.b16 %v722, %v706
    %v1011 = vpack.c.b16 %v723, %v707
    %v1012 = vpack.c.b16 %v724, %v708
    %v1013 = vpack.c.b16 %v725, %v709
    %v1014 = vpack.c.b16 %v726, %v710
    %v1015 = vpack.c.b16 %v727, %v711
    %v1016 = vpack.c.b16 %v728, %v712
    %v1017 = vpack.c.b16 %v729, %v713
    %v1018 = vpack.c.b16 %v730, %v714
    %v1019 = vpack.c.b16 %v731, %v715
    %v1020 = vpack.c.b16 %v732, %v716
    %v1021 = vpack.c.b16 %v733, %v717
    %v1022 = vpack.c.b16 %v734, %v718
    %v1023 = vpack.c.b16 %v735, %v719
    %v1024 = vpack.c.b16 %v736, %v720
    %v1025 = vpack.c.b16 %v753, %v737
    %v1026 = vpack.c.b16 %v754, %v738
    %v1027 = vpack.c.b16 %v755, %v739
    %v1028 = vpack.c.b16 %v756, %v740
    %v1029 = vpack.c.b16 %v757, %v741
    %v1030 = vpack.c.b16 %v758, %v742
    %v1031 = vpack.c.b16 %v759, %v743
    %v1032 = vpack.c.b16 %v760, %v744
    %v1033 = vpack.c.b16 %v761, %v745
    %v1034 = vpack.c.b16 %v762, %v746
    %v1035 = vpack.c.b16 %v763, %v747
    %v1036 = vpack.c.b16 %v764, %v748
    %v1037 = vpack.c.b16 %v765, %v749
    %v1038 = vpack.c.b16 %v766, %v750
    %v1039 = vpack.c.b16 %v767, %v751
    %v1040 = vpack.c.b16 %v768, %v752
    %v1041 = vpack.c.b16 %v785, %v769
    %v1042 = vpack.c.b16 %v786, %v770
    %v1043 = vpack.c.b16 %v787, %v771
    %v1044 = vpack.c.b16 %v788, %v772
    %v1045 = vpack.c.b16 %v789, %v773
    %v1046 = vpack.c.b16 %v790, %v774
    %v1047 = vpack.c.b16 %v791, %v775
    %v1048 = vpack.c.b16 %v792, %v776
    %v1049 = vpack.c.b16 %v793, %v777
    %v1050 = vpack.c.b16 %v794, %v778
    %v1051 = vpack.c.b16 %v795, %v779
    %v1052 = vpack.c.b16 %v796, %v780
    %v1053 = vpack.c.b16 %v797, %v781
    %v1054 = vpack.c.b16 %v798, %v782
    %v1055 = vpack.c.b16 %v799, %v783
    %v1056 = vpack.c.b16 %v800, %v784
    %v1057 = vpack.c.b16 %v817, %v801
    %v1058 = vpack.c.b16 %v818, %v802
    %v1059 = vpack.c.b16 %v819, %v803
    %v1060 = vpack.c.b16 %v820, %v804
    %v1061 = vpack.c.b16 %v821, %v805
    %v1062 = vpack.c.b16 %v822, %v806
    %v1063 = vpack.c.b16 %v823, %v807
    %v1064 = vpack.c.b16 %v824, %v808
    %v1065 = vpack.c.b16 %v825, %v809
    %v1066 = vpack.c.b16 %v826, %v810
    %v1067 = vpack.c.b16 %v827, %v811
    %v1068 = vpack.c.b16 %v828, %v812
    %v1069 = vpack.c.b16 %v829, %v813
    %v1070 = vpack.c.b16 %v830, %v814
    %v1071 = vpack.c.b16 %v831, %v815
    %v1072 = vpack.c.b16 %v832, %v816
    %v1073 = vpack.c.b16 %v849, %v833
    %v1074 = vpack.c.b16 %v850, %v834
    %v1075 = vpack.c.b16 %v851, %v835
    %v1076 = vpack.c.b16 %v852, %v836
    %v1077 = vpack.c.b16 %v853, %v837
    %v1078 = vpack.c.b16 %v854, %v838
    %v1079 = vpack.c.b16 %v855, %v839
    %v1080 = vpack.c.b16 %v856, %v840
    %v1081 = vpack.c.b16 %v857, %v841
    %v1082 = vpack.c.b16 %v858, %v842
    %v1083 = vpack.c.b16 %v859, %v843
    %v1084 = vpack.c.b16 %v860, %v844
    %v1085 = vpack.c.b16 %v861, %v845
    %v1086 = vpack.c.b16 %v862, %v846
    %v1087 = vpack.c.b16 %v863, %v847
    %v1088 = vpack.c.b16 %v864, %v848
    %v1089 = vpack.c.b16 %v881, %v865
    %v1090 = vpack.c.b16 %v882, %v866
    %v1091 = vpack.c.b16 %v883, %v867
    %v1092 = vpack.c.b16 %v884, %v868
    %v1093 = vpack.c.b16 %v885, %v869
    %v1094 = vpack.c.b16 %v886, %v870
    %v1095 = vpack.c.b16 %v887, %v871
    %v1096 = vpack.c.b16 %v888, %v872
    %v1097 = vpack.c.b16 %v889, %v873
    %v1098 = vpack.c.b16 %v890, %v874
    %v1099 = vpack.c.b16 %v891, %v875
    %v1100 = vpack.c.b16 %v892, %v876
    %v1101 = vpack.c.b16 %v893, %v877
    %v1102 = vpack.c.b16 %v894, %v878
    %v1103 = vpack.c.b16 %v895, %v879
    %v1104 = vpack.c.b16 %v896, %v880
    %v1105 = vpack.c.b16 %v913, %v897
    %v1106 = vpack.c.b16 %v914, %v898
    %v1107 = vpack.c.b16 %v915, %v899
    %v1108 = vpack.c.b16 %v916, %v900
    %v1109 = vpack.c.b16 %v917, %v901
    %v1110 = vpack.c.b16 %v918, %v902
    %v1111 = vpack.c.b16 %v919, %v903
    %v1112 = vpack.c.b16 %v920, %v904
    %v1113 = vpack.c.b16 %v921, %v905
    %v1114 = vpack.c.b16 %v922, %v906
    %v1115 = vpack.c.b16 %v923, %v907
    %v1116 = vpack.c.b16 %v924, %v908
    %v1117 = vpack.c.b16 %v925, %v909
    %v1118 = vpack.c.b16 %v926, %v910
    %v1119 = vpack.c.b16 %v927, %v911
    %v1120 = vpack.c.b16 %v928, %v912
    %vm1313 = vcmask 523264
    %v1315 = vsel %vm1313, %v76, 0
    %1317 = vmatprep.subr.bf16.mxu0 %v1042
    %1318 = vmatpush1.bf16.msra.mxu0 %v1041
    %1319 = vmatprep.subr.bf16.mxu0 %v1026
    %1320 = vmatpush1.bf16.msra.mxu0 %v1025
    %1321 = vmatprep.subr.bf16.mxu0 %v1010
    %1322 = vmatpush1.bf16.msra.mxu0 %v1009
    %1323 = vmatprep.subr.bf16.mxu0 %v994
    %1324 = vmatpush1.bf16.msra.mxu0 %v993
    %1325 = vmatprep.subr.bf16.mxu0 %v978
    %1326 = vmatpush1.bf16.msra.mxu0 %v977
    %1327 = vmatprep.subr.bf16.mxu0 %v962
    %1328 = vmatpush1.bf16.msra.mxu0 %v961
    %1329 = vmatprep.subr.bf16.mxu0 %v946
    %1330 = vmatpush1.bf16.msra.mxu0 %v945
    %1331 = vmatprep.subr.bf16.mxu0 %v930
    %1332 = vmatpush1.bf16.msra.mxu0 %v929
    %1333 = vmatprep.subr.bf16.mxu0 0
    %1334 = vmatpush2.bf16.msra.mxu0 0
    %1335 = vmatprep.subr.bf16.mxu0 0
    %1336 = vmatpush2.bf16.msra.mxu0 0
    %1337 = vmatprep.subr.bf16.mxu0 0
    %1338 = vmatpush2.bf16.msra.mxu0 0
    %1339 = vmatprep.subr.bf16.mxu0 0
    %1340 = vmatpush2.bf16.msra.mxu0 0
    %1341 = vmatprep.subr.bf16.mxu0 %v1106
    %1342 = vmatpush2.bf16.msra.mxu0 %v1105
    %1343 = vmatprep.subr.bf16.mxu0 %v1090
    %1344 = vmatpush2.bf16.msra.mxu0 %v1089
    %1345 = vmatprep.subr.bf16.mxu0 %v1074
    %1346 = vmatpush2.bf16.msra.mxu0 %v1073
    %1347 = vmatprep.subr.bf16.mxu0 %v1058
    %1348 = vmatpush2.bf16.msra.mxu0 %v1057
    %1349 = vmatprep.mubr.bf16.mxu0 %v1315
    %1350 = vmatmul.mubr.bf16.gmra.mxu0 %v75
    %v1351 = vpop.f32.mrf.mxu0
    %v1352 = vadd.f32 %v276, %v1351
    %v1353 = vpop.f32.mrf.mxu0
    %v1354 = vadd.f32 %v280, %v1353
    %v1355 = vpop.f32.mrf.mxu0
    %v1356 = vpop.f32.mrf.mxu0
    %1357 = vdwg.mxu0
    %1358 = vmatprep.subr.bf16.mxu0 %v1044
    %1359 = vmatpush1.bf16.msra.mxu0 %v1043
    %1360 = vmatprep.subr.bf16.mxu0 %v1028
    %1361 = vmatpush1.bf16.msra.mxu0 %v1027
    %1362 = vmatprep.subr.bf16.mxu0 %v1012
    %1363 = vmatpush1.bf16.msra.mxu0 %v1011
    %1364 = vmatprep.subr.bf16.mxu0 %v996
    %1365 = vmatpush1.bf16.msra.mxu0 %v995
    %1366 = vmatprep.subr.bf16.mxu0 %v980
    %1367 = vmatpush1.bf16.msra.mxu0 %v979
    %1368 = vmatprep.subr.bf16.mxu0 %v964
    %1369 = vmatpush1.bf16.msra.mxu0 %v963
    %1370 = vmatprep.subr.bf16.mxu0 %v948
    %1371 = vmatpush1.bf16.msra.mxu0 %v947
    %1372 = vmatprep.subr.bf16.mxu0 %v932
    %1373 = vmatpush1.bf16.msra.mxu0 %v931
    %1374 = vmatprep.subr.bf16.mxu0 0
    %1375 = vmatpush2.bf16.msra.mxu0 0
    %1376 = vmatprep.subr.bf16.mxu0 0
    %1377 = vmatpush2.bf16.msra.mxu0 0
    %1378 = vmatprep.subr.bf16.mxu0 0
    %1379 = vmatpush2.bf16.msra.mxu0 0
    %1380 = vmatprep.subr.bf16.mxu0 0
    %1381 = vmatpush2.bf16.msra.mxu0 0
    %1382 = vmatprep.subr.bf16.mxu0 %v1108
    %1383 = vmatpush2.bf16.msra.mxu0 %v1107
    %1384 = vmatprep.subr.bf16.mxu0 %v1092
    %1385 = vmatpush2.bf16.msra.mxu0 %v1091
    %1386 = vmatprep.subr.bf16.mxu0 %v1076
    %1387 = vmatpush2.bf16.msra.mxu0 %v1075
    %1388 = vmatprep.subr.bf16.mxu0 %v1060
    %1389 = vmatpush2.bf16.msra.mxu0 %v1059
    %1390 = vmatprep.mubr.bf16.mxu0 %v1315
    %1391 = vmatmul.mubr.bf16.gmra.mxu0 %v75
    %v1392 = vpop.f32.mrf.mxu0
    %v1393 = vadd.f32 %v284, %v1392
    %v1394 = vpop.f32.mrf.mxu0
    %v1395 = vadd.f32 %v288, %v1394
    %v1396 = vpop.f32.mrf.mxu0
    %v1397 = vpop.f32.mrf.mxu0
    %1398 = vdwg.mxu0
    %1399 = vmatprep.subr.bf16.mxu0 %v1046
    %1400 = vmatpush1.bf16.msra.mxu0 %v1045
    %1401 = vmatprep.subr.bf16.mxu0 %v1030
    %1402 = vmatpush1.bf16.msra.mxu0 %v1029
    %1403 = vmatprep.subr.bf16.mxu0 %v1014
    %1404 = vmatpush1.bf16.msra.mxu0 %v1013
    %1405 = vmatprep.subr.bf16.mxu0 %v998
    %1406 = vmatpush1.bf16.msra.mxu0 %v997
    %1407 = vmatprep.subr.bf16.mxu0 %v982
    %1408 = vmatpush1.bf16.msra.mxu0 %v981
    %1409 = vmatprep.subr.bf16.mxu0 %v966
    %1410 = vmatpush1.bf16.msra.mxu0 %v965
    %1411 = vmatprep.subr.bf16.mxu0 %v950
    %1412 = vmatpush1.bf16.msra.mxu0 %v949
    %1413 = vmatprep.subr.bf16.mxu0 %v934
    %1414 = vmatpush1.bf16.msra.mxu0 %v933
    %1415 = vmatprep.subr.bf16.mxu0 0
    %1416 = vmatpush2.bf16.msra.mxu0 0
    %1417 = vmatprep.subr.bf16.mxu0 0
    %1418 = vmatpush2.bf16.msra.mxu0 0
    %1419 = vmatprep.subr.bf16.mxu0 0
    %1420 = vmatpush2.bf16.msra.mxu0 0
    %1421 = vmatprep.subr.bf16.mxu0 0
    %1422 = vmatpush2.bf16.msra.mxu0 0
    %1423 = vmatprep.subr.bf16.mxu0 %v1110
    %1424 = vmatpush2.bf16.msra.mxu0 %v1109
    %1425 = vmatprep.subr.bf16.mxu0 %v1094
    %1426 = vmatpush2.bf16.msra.mxu0 %v1093
    %1427 = vmatprep.subr.bf16.mxu0 %v1078
    %1428 = vmatpush2.bf16.msra.mxu0 %v1077
    %1429 = vmatprep.subr.bf16.mxu0 %v1062
    %1430 = vmatpush2.bf16.msra.mxu0 %v1061
    %1431 = vmatprep.mubr.bf16.mxu0 %v1315
    %1432 = vmatmul.mubr.bf16.gmra.mxu0 %v75
    %v1433 = vpop.f32.mrf.mxu0
    %v1434 = vadd.f32 %v292, %v1433
    %v1435 = vpop.f32.mrf.mxu0
    %v1436 = vadd.f32 %v296, %v1435
    %v1437 = vpop.f32.mrf.mxu0
    %v1438 = vpop.f32.mrf.mxu0
    %1439 = vdwg.mxu0
    %1440 = vmatprep.subr.bf16.mxu0 %v1048
    %1441 = vmatpush1.bf16.msra.mxu0 %v1047
    %1442 = vmatprep.subr.bf16.mxu0 %v1032
    %1443 = vmatpush1.bf16.msra.mxu0 %v1031
    %1444 = vmatprep.subr.bf16.mxu0 %v1016
    %1445 = vmatpush1.bf16.msra.mxu0 %v1015
    %1446 = vmatprep.subr.bf16.mxu0 %v1000
    %1447 = vmatpush1.bf16.msra.mxu0 %v999
    %1448 = vmatprep.subr.bf16.mxu0 %v984
    %1449 = vmatpush1.bf16.msra.mxu0 %v983
    %1450 = vmatprep.subr.bf16.mxu0 %v968
    %1451 = vmatpush1.bf16.msra.mxu0 %v967
    %1452 = vmatprep.subr.bf16.mxu0 %v952
    %1453 = vmatpush1.bf16.msra.mxu0 %v951
    %1454 = vmatprep.subr.bf16.mxu0 %v936
    %1455 = vmatpush1.bf16.msra.mxu0 %v935
    %1456 = vmatprep.subr.bf16.mxu0 0
    %1457 = vmatpush2.bf16.msra.mxu0 0
    %1458 = vmatprep.subr.bf16.mxu0 0
    %1459 = vmatpush2.bf16.msra.mxu0 0
    %1460 = vmatprep.subr.bf16.mxu0 0
    %1461 = vmatpush2.bf16.msra.mxu0 0
    %1462 = vmatprep.subr.bf16.mxu0 0
    %1463 = vmatpush2.bf16.msra.mxu0 0
    %1464 = vmatprep.subr.bf16.mxu0 %v1112
    %1465 = vmatpush2.bf16.msra.mxu0 %v1111
    %1466 = vmatprep.subr.bf16.mxu0 %v1096
    %1467 = vmatpush2.bf16.msra.mxu0 %v1095
    %1468 = vmatprep.subr.bf16.mxu0 %v1080
    %1469 = vmatpush2.bf16.msra.mxu0 %v1079
    %1470 = vmatprep.subr.bf16.mxu0 %v1064
    %1471 = vmatpush2.bf16.msra.mxu0 %v1063
    %1472 = vmatprep.mubr.bf16.mxu0 %v1315
    %1473 = vmatmul.mubr.bf16.gmra.mxu0 %v75
    %v1474 = vpop.f32.mrf.mxu0
    %v1475 = vadd.f32 %v300, %v1474
    %v1476 = vpop.f32.mrf.mxu0
    %v1477 = vadd.f32 %v304, %v1476
    %v1478 = vpop.f32.mrf.mxu0
    %v1479 = vpop.f32.mrf.mxu0
    %1480 = vdwg.mxu0
    %1481 = vmatprep.subr.bf16.mxu0 %v1050
    %1482 = vmatpush1.bf16.msra.mxu0 %v1049
    %1483 = vmatprep.subr.bf16.mxu0 %v1034
    %1484 = vmatpush1.bf16.msra.mxu0 %v1033
    %1485 = vmatprep.subr.bf16.mxu0 %v1018
    %1486 = vmatpush1.bf16.msra.mxu0 %v1017
    %1487 = vmatprep.subr.bf16.mxu0 %v1002
    %1488 = vmatpush1.bf16.msra.mxu0 %v1001
    %1489 = vmatprep.subr.bf16.mxu0 %v986
    %1490 = vmatpush1.bf16.msra.mxu0 %v985
    %1491 = vmatprep.subr.bf16.mxu0 %v970
    %1492 = vmatpush1.bf16.msra.mxu0 %v969
    %1493 = vmatprep.subr.bf16.mxu0 %v954
    %1494 = vmatpush1.bf16.msra.mxu0 %v953
    %1495 = vmatprep.subr.bf16.mxu0 %v938
    %1496 = vmatpush1.bf16.msra.mxu0 %v937
    %1497 = vmatprep.subr.bf16.mxu0 0
    %1498 = vmatpush2.bf16.msra.mxu0 0
    %1499 = vmatprep.subr.bf16.mxu0 0
    %1500 = vmatpush2.bf16.msra.mxu0 0
    %1501 = vmatprep.subr.bf16.mxu0 0
    %1502 = vmatpush2.bf16.msra.mxu0 0
    %1503 = vmatprep.subr.bf16.mxu0 0
    %1504 = vmatpush2.bf16.msra.mxu0 0
    %1505 = vmatprep.subr.bf16.mxu0 %v1114
    %1506 = vmatpush2.bf16.msra.mxu0 %v1113
    %1507 = vmatprep.subr.bf16.mxu0 %v1098
    %1508 = vmatpush2.bf16.msra.mxu0 %v1097
    %1509 = vmatprep.subr.bf16.mxu0 %v1082
    %1510 = vmatpush2.bf16.msra.mxu0 %v1081
    %1511 = vmatprep.subr.bf16.mxu0 %v1066
    %1512 = vmatpush2.bf16.msra.mxu0 %v1065
    %1513 = vmatprep.mubr.bf16.mxu0 %v1315
    %1514 = vmatmul.mubr.bf16.gmra.mxu0 %v75
    %v1515 = vpop.f32.mrf.mxu0
    %v1516 = vadd.f32 %v308, %v1515
    %v1517 = vpop.f32.mrf.mxu0
    %v1518 = vadd.f32 %v312, %v1517
    %v1519 = vpop.f32.mrf.mxu0
    %v1520 = vpop.f32.mrf.mxu0
    %1521 = vdwg.mxu0
    %1522 = vmatprep.subr.bf16.mxu0 %v1052
    %1523 = vmatpush1.bf16.msra.mxu0 %v1051
    %1524 = vmatprep.subr.bf16.mxu0 %v1036
    %1525 = vmatpush1.bf16.msra.mxu0 %v1035
    %1526 = vmatprep.subr.bf16.mxu0 %v1020
    %1527 = vmatpush1.bf16.msra.mxu0 %v1019
    %1528 = vmatprep.subr.bf16.mxu0 %v1004
    %1529 = vmatpush1.bf16.msra.mxu0 %v1003
    %1530 = vmatprep.subr.bf16.mxu0 %v988
    %1531 = vmatpush1.bf16.msra.mxu0 %v987
    %1532 = vmatprep.subr.bf16.mxu0 %v972
    %1533 = vmatpush1.bf16.msra.mxu0 %v971
    %1534 = vmatprep.subr.bf16.mxu0 %v956
    %1535 = vmatpush1.bf16.msra.mxu0 %v955
    %1536 = vmatprep.subr.bf16.mxu0 %v940
    %1537 = vmatpush1.bf16.msra.mxu0 %v939
    %1538 = vmatprep.subr.bf16.mxu0 0
    %1539 = vmatpush2.bf16.msra.mxu0 0
    %1540 = vmatprep.subr.bf16.mxu0 0
    %1541 = vmatpush2.bf16.msra.mxu0 0
    %1542 = vmatprep.subr.bf16.mxu0 0
    %1543 = vmatpush2.bf16.msra.mxu0 0
    %1544 = vmatprep.subr.bf16.mxu0 0
    %1545 = vmatpush2.bf16.msra.mxu0 0
    %1546 = vmatprep.subr.bf16.mxu0 %v1116
    %1547 = vmatpush2.bf16.msra.mxu0 %v1115
    %1548 = vmatprep.subr.bf16.mxu0 %v1100
    %1549 = vmatpush2.bf16.msra.mxu0 %v1099
    %1550 = vmatprep.subr.bf16.mxu0 %v1084
    %1551 = vmatpush2.bf16.msra.mxu0 %v1083
    %1552 = vmatprep.subr.bf16.mxu0 %v1068
    %1553 = vmatpush2.bf16.msra.mxu0 %v1067
    %1554 = vmatprep.mubr.bf16.mxu0 %v1315
    %1555 = vmatmul.mubr.bf16.gmra.mxu0 %v75
    %v1556 = vpop.f32.mrf.mxu0
    %v1557 = vadd.f32 %v316, %v1556
    %v1558 = vpop.f32.mrf.mxu0
    %v1559 = vadd.f32 %v320, %v1558
    %v1560 = vpop.f32.mrf.mxu0
    %v1561 = vpop.f32.mrf.mxu0
    %1562 = vdwg.mxu0
    %1563 = vmatprep.subr.bf16.mxu0 %v1054
    %1564 = vmatpush1.bf16.msra.mxu0 %v1053
    %1565 = vmatprep.subr.bf16.mxu0 %v1038
    %1566 = vmatpush1.bf16.msra.mxu0 %v1037
    %1567 = vmatprep.subr.bf16.mxu0 %v1022
    %1568 = vmatpush1.bf16.msra.mxu0 %v1021
    %1569 = vmatprep.subr.bf16.mxu0 %v1006
    %1570 = vmatpush1.bf16.msra.mxu0 %v1005
    %1571 = vmatprep.subr.bf16.mxu0 %v990
    %1572 = vmatpush1.bf16.msra.mxu0 %v989
    %1573 = vmatprep.subr.bf16.mxu0 %v974
    %1574 = vmatpush1.bf16.msra.mxu0 %v973
    %1575 = vmatprep.subr.bf16.mxu0 %v958
    %1576 = vmatpush1.bf16.msra.mxu0 %v957
    %1577 = vmatprep.subr.bf16.mxu0 %v942
    %1578 = vmatpush1.bf16.msra.mxu0 %v941
    %1579 = vmatprep.subr.bf16.mxu0 0
    %1580 = vmatpush2.bf16.msra.mxu0 0
    %1581 = vmatprep.subr.bf16.mxu0 0
    %1582 = vmatpush2.bf16.msra.mxu0 0
    %1583 = vmatprep.subr.bf16.mxu0 0
    %1584 = vmatpush2.bf16.msra.mxu0 0
    %1585 = vmatprep.subr.bf16.mxu0 0
    %1586 = vmatpush2.bf16.msra.mxu0 0
    %1587 = vmatprep.subr.bf16.mxu0 %v1118
    %1588 = vmatpush2.bf16.msra.mxu0 %v1117
    %1589 = vmatprep.subr.bf16.mxu0 %v1102
    %1590 = vmatpush2.bf16.msra.mxu0 %v1101
    %1591 = vmatprep.subr.bf16.mxu0 %v1086
    %1592 = vmatpush2.bf16.msra.mxu0 %v1085
    %1593 = vmatprep.subr.bf16.mxu0 %v1070
    %1594 = vmatpush2.bf16.msra.mxu0 %v1069
    %1595 = vmatprep.mubr.bf16.mxu0 %v1315
    %1596 = vmatmul.mubr.bf16.gmra.mxu0 %v75
    %v1597 = vpop.f32.mrf.mxu0
    %v1598 = vadd.f32 %v324, %v1597
    %v1599 = vpop.f32.mrf.mxu0
    %v1600 = vadd.f32 %v328, %v1599
    %v1601 = vpop.f32.mrf.mxu0
    %v1602 = vpop.f32.mrf.mxu0
    %1603 = vdwg.mxu0
    %1604 = vmatprep.subr.bf16.mxu0 %v1056
    %1605 = vmatpush1.bf16.msra.mxu0 %v1055
    %1606 = vmatprep.subr.bf16.mxu0 %v1040
    %1607 = vmatpush1.bf16.msra.mxu0 %v1039
    %1608 = vmatprep.subr.bf16.mxu0 %v1024
    %1609 = vmatpush1.bf16.msra.mxu0 %v1023
    %1610 = vmatprep.subr.bf16.mxu0 %v1008
    %1611 = vmatpush1.bf16.msra.mxu0 %v1007
    %1612 = vmatprep.subr.bf16.mxu0 %v992
    %1613 = vmatpush1.bf16.msra.mxu0 %v991
    %1614 = vmatprep.subr.bf16.mxu0 %v976
    %1615 = vmatpush1.bf16.msra.mxu0 %v975
    %1616 = vmatprep.subr.bf16.mxu0 %v960
    %1617 = vmatpush1.bf16.msra.mxu0 %v959
    %1618 = vmatprep.subr.bf16.mxu0 %v944
    %1619 = vmatpush1.bf16.msra.mxu0 %v943
    %1620 = vmatprep.subr.bf16.mxu0 0
    %1621 = vmatpush2.bf16.msra.mxu0 0
    %1622 = vmatprep.subr.bf16.mxu0 0
    %1623 = vmatpush2.bf16.msra.mxu0 0
    %1624 = vmatprep.subr.bf16.mxu0 0
    %1625 = vmatpush2.bf16.msra.mxu0 0
    %1626 = vmatprep.subr.bf16.mxu0 0
    %1627 = vmatpush2.bf16.msra.mxu0 0
    %1628 = vmatprep.subr.bf16.mxu0 %v1120
    %1629 = vmatpush2.bf16.msra.mxu0 %v1119
    %1630 = vmatprep.subr.bf16.mxu0 %v1104
    %1631 = vmatpush2.bf16.msra.mxu0 %v1103
    %1632 = vmatprep.subr.bf16.mxu0 %v1088
    %1633 = vmatpush2.bf16.msra.mxu0 %v1087
    %1634 = vmatprep.subr.bf16.mxu0 %v1072
    %1635 = vmatpush2.bf16.msra.mxu0 %v1071
    %1636 = vmatprep.mubr.bf16.mxu0 %v1315
    %1637 = vmatmul.mubr.bf16.gmra.mxu0 %v75
    %v1638 = vpop.f32.mrf.mxu0
    %v1639 = vadd.f32 %v332, %v1638
    %v1640 = vpop.f32.mrf.mxu0
    %v1641 = vadd.f32 %v336, %v1640
    %v1642 = vpop.f32.mrf.mxu0
    %v1643 = vpop.f32.mrf.mxu0
    %1644 = vdwg.mxu0
    %v1645 = vmax.f32 %v1352, 0.0
    %v1646 = vmax.f32 %v1354, 0.0
    %v1647 = vmax.f32 %v1393, 0.0
    %v1648 = vmax.f32 %v1395, 0.0
    %v1649 = vmax.f32 %v1434, 0.0
    %v1650 = vmax.f32 %v1436, 0.0
    %v1651 = vmax.f32 %v1475, 0.0
    %v1652 = vmax.f32 %v1477, 0.0
    %v1653 = vmax.f32 %v1516, 0.0
    %v1654 = vmax.f32 %v1518, 0.0
    %v1655 = vmax.f32 %v1557, 0.0
    %v1656 = vmax.f32 %v1559, 0.0
    %v1657 = vmax.f32 %v1598, 0.0
    %v1658 = vmax.f32 %v1600, 0.0
    %v1659 = vmax.f32 %v1639, 0.0
    %v1660 = vmax.f32 %v1641, 0.0
    %v1661 = vpack.c.bf16 %v1645, %v1645
    %v1662 = vpack.c.bf16 %v1646, %v1646
    %v1663 = vpack.c.bf16 %v1647, %v1647
    %v1664 = vpack.c.bf16 %v1648, %v1648
    %v1665 = vpack.c.bf16 %v1649, %v1649
    %v1666 = vpack.c.bf16 %v1650, %v1650
    %v1667 = vpack.c.bf16 %v1651, %v1651
    %v1668 = vpack.c.bf16 %v1652, %v1652
    %v1669 = vpack.c.bf16 %v1653, %v1653
    %v1670 = vpack.c.bf16 %v1654, %v1654
    %v1671 = vpack.c.bf16 %v1655, %v1655
    %v1672 = vpack.c.bf16 %v1656, %v1656
    %v1673 = vpack.c.bf16 %v1657, %v1657
    %v1674 = vpack.c.bf16 %v1658, %v1658
    %v1675 = vpack.c.bf16 %v1659, %v1659
    %v1676 = vpack.c.bf16 %v1660, %v1660
    %v1677 = vld [vmem:[#allocation8] sm:$0xf]
    %v1678 = vld [vmem:[#allocation8 + $0x4] sm:$0xf]
    %v1679 = vld [vmem:[#allocation8 + $0x8] sm:$0xf]
    %v1680 = vld [vmem:[#allocation8 + $0xc] sm:$0xf]
    %v1681 = vld [vmem:[#allocation8 + $0x10] sm:$0xf]
    %v1682 = vld [vmem:[#allocation8 + $0x14] sm:$0xf]
    %v1683 = vld [vmem:[#allocation8 + $0x18] sm:$0xf]
    %v1684 = vld [vmem:[#allocation8 + $0x1c] sm:$0xf]
    %v1685 = vld [vmem:[#allocation8 + $0x20] sm:$0xf]
    %v1686 = vld [vmem:[#allocation8 + $0x24] sm:$0xf]
    %v1687 = vld [vmem:[#allocation8 + $0x28] sm:$0xf]
    %v1688 = vld [vmem:[#allocation8 + $0x2c] sm:$0xf]
    %v1689 = vld [vmem:[#allocation8 + $0x30] sm:$0xf]
    %v1690 = vld [vmem:[#allocation8 + $0x34] sm:$0xf]
    %v1691 = vld [vmem:[#allocation8 + $0x38] sm:$0xf]
    %v1692 = vld [vmem:[#allocation8 + $0x3c] sm:$0xf]
    %v1693 = vld [vmem:[#allocation8 + $0x40] sm:$0xf]
    %v1694 = vld [vmem:[#allocation8 + $0x44] sm:$0xf]
    %v1695 = vld [vmem:[#allocation8 + $0x48] sm:$0xf]
    %v1696 = vld [vmem:[#allocation8 + $0x4c] sm:$0xf]
    %v1697 = vld [vmem:[#allocation8 + $0x50] sm:$0xf]
    %v1698 = vld [vmem:[#allocation8 + $0x54] sm:$0xf]
    %v1699 = vld [vmem:[#allocation8 + $0x58] sm:$0xf]
    %v1700 = vld [vmem:[#allocation8 + $0x5c] sm:$0xf]
    %v1701 = vld [vmem:[#allocation8 + $0x60] sm:$0xf]
    %v1702 = vld [vmem:[#allocation8 + $0x64] sm:$0xf]
    %v1703 = vld [vmem:[#allocation8 + $0x68] sm:$0xf]
    %v1704 = vld [vmem:[#allocation8 + $0x6c] sm:$0xf]
    %v1705 = vld [vmem:[#allocation8 + $0x70] sm:$0xf]
    %v1706 = vld [vmem:[#allocation8 + $0x74] sm:$0xf]
    %v1707 = vld [vmem:[#allocation8 + $0x78] sm:$0xf]
    %v1708 = vld [vmem:[#allocation8 + $0x7c] sm:$0xf]
    %v1709 = vld [vmem:[#allocation8 + $0x80] sm:$0xf]
    %v1710 = vld [vmem:[#allocation8 + $0x84] sm:$0xf]
    %v1711 = vld [vmem:[#allocation8 + $0x88] sm:$0xf]
    %v1712 = vld [vmem:[#allocation8 + $0x8c] sm:$0xf]
    %v1713 = vld [vmem:[#allocation8 + $0x90] sm:$0xf]
    %v1714 = vld [vmem:[#allocation8 + $0x94] sm:$0xf]
    %v1715 = vld [vmem:[#allocation8 + $0x98] sm:$0xf]
    %v1716 = vld [vmem:[#allocation8 + $0x9c] sm:$0xf]
    %v1717 = vld [vmem:[#allocation8 + $0xa0] sm:$0xf]
    %v1718 = vld [vmem:[#allocation8 + $0xa4] sm:$0xf]
    %v1719 = vld [vmem:[#allocation8 + $0xa8] sm:$0xf]
    %v1720 = vld [vmem:[#allocation8 + $0xac] sm:$0xf]
    %v1721 = vld [vmem:[#allocation8 + $0xb0] sm:$0xf]
    %v1722 = vld [vmem:[#allocation8 + $0xb4] sm:$0xf]
    %v1723 = vld [vmem:[#allocation8 + $0xb8] sm:$0xf]
    %v1724 = vld [vmem:[#allocation8 + $0xbc] sm:$0xf]
    %v1725 = vld [vmem:[#allocation8 + $0xc0] sm:$0xf]
    %v1726 = vld [vmem:[#allocation8 + $0xc4] sm:$0xf]
    %v1727 = vld [vmem:[#allocation8 + $0xc8] sm:$0xf]
    %v1728 = vld [vmem:[#allocation8 + $0xcc] sm:$0xf]
    %v1729 = vld [vmem:[#allocation8 + $0xd0] sm:$0xf]
    %v1730 = vld [vmem:[#allocation8 + $0xd4] sm:$0xf]
    %v1731 = vld [vmem:[#allocation8 + $0xd8] sm:$0xf]
    %v1732 = vld [vmem:[#allocation8 + $0xdc] sm:$0xf]
    %v1733 = vld [vmem:[#allocation8 + $0xe0] sm:$0xf]
    %v1734 = vld [vmem:[#allocation8 + $0xe4] sm:$0xf]
    %v1735 = vld [vmem:[#allocation8 + $0xe8] sm:$0xf]
    %v1736 = vld [vmem:[#allocation8 + $0xec] sm:$0xf]
    %v1737 = vld [vmem:[#allocation8 + $0xf0] sm:$0xf]
    %v1738 = vld [vmem:[#allocation8 + $0xf4] sm:$0xf]
    %v1739 = vld [vmem:[#allocation8 + $0xf8] sm:$0xf]
    %v1740 = vld [vmem:[#allocation8 + $0xfc] sm:$0xf]
    %v1741 = vld [vmem:[#allocation8 + $0x100] sm:$0xf]
    %v1742 = vld [vmem:[#allocation8 + $0x104] sm:$0xf]
    %v1743 = vld [vmem:[#allocation8 + $0x108] sm:$0xf]
    %v1744 = vld [vmem:[#allocation8 + $0x10c] sm:$0xf]
    %v1745 = vld [vmem:[#allocation8 + $0x110] sm:$0xf]
    %v1746 = vld [vmem:[#allocation8 + $0x114] sm:$0xf]
    %v1747 = vld [vmem:[#allocation8 + $0x118] sm:$0xf]
    %v1748 = vld [vmem:[#allocation8 + $0x11c] sm:$0xf]
    %v1749 = vld [vmem:[#allocation8 + $0x120] sm:$0xf]
    %v1750 = vld [vmem:[#allocation8 + $0x124] sm:$0xf]
    %v1751 = vld [vmem:[#allocation8 + $0x128] sm:$0xf]
    %v1752 = vld [vmem:[#allocation8 + $0x12c] sm:$0xf]
    %v1753 = vld [vmem:[#allocation8 + $0x130] sm:$0xf]
    %v1754 = vld [vmem:[#allocation8 + $0x134] sm:$0xf]
    %v1755 = vld [vmem:[#allocation8 + $0x138] sm:$0xf]
    %v1756 = vld [vmem:[#allocation8 + $0x13c] sm:$0xf]
    %v1757 = vld [vmem:[#allocation8 + $0x140] sm:$0xf]
    %v1758 = vld [vmem:[#allocation8 + $0x144] sm:$0xf]
    %v1759 = vld [vmem:[#allocation8 + $0x148] sm:$0xf]
    %v1760 = vld [vmem:[#allocation8 + $0x14c] sm:$0xf]
    %v1761 = vld [vmem:[#allocation8 + $0x150] sm:$0xf]
    %v1762 = vld [vmem:[#allocation8 + $0x154] sm:$0xf]
    %v1763 = vld [vmem:[#allocation8 + $0x158] sm:$0xf]
    %v1764 = vld [vmem:[#allocation8 + $0x15c] sm:$0xf]
    %v1765 = vld [vmem:[#allocation8 + $0x160] sm:$0xf]
    %v1766 = vld [vmem:[#allocation8 + $0x164] sm:$0xf]
    %v1767 = vld [vmem:[#allocation8 + $0x168] sm:$0xf]
    %v1768 = vld [vmem:[#allocation8 + $0x16c] sm:$0xf]
    %v1769 = vld [vmem:[#allocation8 + $0x170] sm:$0xf]
    %v1770 = vld [vmem:[#allocation8 + $0x174] sm:$0xf]
    %v1771 = vld [vmem:[#allocation8 + $0x178] sm:$0xf]
    %v1772 = vld [vmem:[#allocation8 + $0x17c] sm:$0xf]
    %v1773 = vld [vmem:[#allocation8 + $0x180] sm:$0xf]
    %v1774 = vld [vmem:[#allocation8 + $0x184] sm:$0xf]
    %v1775 = vld [vmem:[#allocation8 + $0x188] sm:$0xf]
    %v1776 = vld [vmem:[#allocation8 + $0x18c] sm:$0xf]
    %v1777 = vld [vmem:[#allocation8 + $0x190] sm:$0xf]
    %v1778 = vld [vmem:[#allocation8 + $0x194] sm:$0xf]
    %v1779 = vld [vmem:[#allocation8 + $0x198] sm:$0xf]
    %v1780 = vld [vmem:[#allocation8 + $0x19c] sm:$0xf]
    %v1781 = vld [vmem:[#allocation8 + $0x1a0] sm:$0xf]
    %v1782 = vld [vmem:[#allocation8 + $0x1a4] sm:$0xf]
    %v1783 = vld [vmem:[#allocation8 + $0x1a8] sm:$0xf]
    %v1784 = vld [vmem:[#allocation8 + $0x1ac] sm:$0xf]
    %v1785 = vld [vmem:[#allocation8 + $0x1b0] sm:$0xf]
    %v1786 = vld [vmem:[#allocation8 + $0x1b4] sm:$0xf]
    %v1787 = vld [vmem:[#allocation8 + $0x1b8] sm:$0xf]
    %v1788 = vld [vmem:[#allocation8 + $0x1bc] sm:$0xf]
    %v1789 = vld [vmem:[#allocation8 + $0x1c0] sm:$0xf]
    %v1790 = vld [vmem:[#allocation8 + $0x1c4] sm:$0xf]
    %v1791 = vld [vmem:[#allocation8 + $0x1c8] sm:$0xf]
    %v1792 = vld [vmem:[#allocation8 + $0x1cc] sm:$0xf]
    %v1793 = vld [vmem:[#allocation8 + $0x1d0] sm:$0xf]
    %v1794 = vld [vmem:[#allocation8 + $0x1d4] sm:$0xf]
    %v1795 = vld [vmem:[#allocation8 + $0x1d8] sm:$0xf]
    %v1796 = vld [vmem:[#allocation8 + $0x1dc] sm:$0xf]
    %v1797 = vld [vmem:[#allocation8 + $0x1e0] sm:$0xf]
    %v1798 = vld [vmem:[#allocation8 + $0x1e4] sm:$0xf]
    %v1799 = vld [vmem:[#allocation8 + $0x1e8] sm:$0xf]
    %v1800 = vld [vmem:[#allocation8 + $0x1ec] sm:$0xf]
    %v1801 = vld [vmem:[#allocation8 + $0x1f0] sm:$0xf]
    %v1802 = vld [vmem:[#allocation8 + $0x1f4] sm:$0xf]
    %v1803 = vld [vmem:[#allocation8 + $0x1f8] sm:$0xf]
    %v1804 = vld [vmem:[#allocation8 + $0x1fc] sm:$0xf]
    %v1805 = vld [vmem:[#allocation8 + $0x200] sm:$0xf]
    %v1806 = vld [vmem:[#allocation8 + $0x204] sm:$0xf]
    %v1807 = vld [vmem:[#allocation8 + $0x208] sm:$0xf]
    %v1808 = vld [vmem:[#allocation8 + $0x20c] sm:$0xf]
    %v1809 = vld [vmem:[#allocation8 + $0x210] sm:$0xf]
    %v1810 = vld [vmem:[#allocation8 + $0x214] sm:$0xf]
    %v1811 = vld [vmem:[#allocation8 + $0x218] sm:$0xf]
    %v1812 = vld [vmem:[#allocation8 + $0x21c] sm:$0xf]
    %v1813 = vld [vmem:[#allocation8 + $0x220] sm:$0xf]
    %v1814 = vld [vmem:[#allocation8 + $0x224] sm:$0xf]
    %v1815 = vld [vmem:[#allocation8 + $0x228] sm:$0xf]
    %v1816 = vld [vmem:[#allocation8 + $0x22c] sm:$0xf]
    %v1817 = vld [vmem:[#allocation8 + $0x230] sm:$0xf]
    %v1818 = vld [vmem:[#allocation8 + $0x234] sm:$0xf]
    %v1819 = vld [vmem:[#allocation8 + $0x238] sm:$0xf]
    %v1820 = vld [vmem:[#allocation8 + $0x23c] sm:$0xf]
    %v1821 = vld [vmem:[#allocation8 + $0x240] sm:$0xf]
    %v1822 = vld [vmem:[#allocation8 + $0x244] sm:$0xf]
    %v1823 = vld [vmem:[#allocation8 + $0x248] sm:$0xf]
    %v1824 = vld [vmem:[#allocation8 + $0x24c] sm:$0xf]
    %v1825 = vld [vmem:[#allocation8 + $0x250] sm:$0xf]
    %v1826 = vld [vmem:[#allocation8 + $0x254] sm:$0xf]
    %v1827 = vld [vmem:[#allocation8 + $0x258] sm:$0xf]
    %v1828 = vld [vmem:[#allocation8 + $0x25c] sm:$0xf]
    %v1829 = vld [vmem:[#allocation8 + $0x260] sm:$0xf]
    %v1830 = vld [vmem:[#allocation8 + $0x264] sm:$0xf]
    %v1831 = vld [vmem:[#allocation8 + $0x268] sm:$0xf]
    %v1832 = vld [vmem:[#allocation8 + $0x26c] sm:$0xf]
    %v1833 = vld [vmem:[#allocation8 + $0x270] sm:$0xf]
    %v1834 = vld [vmem:[#allocation8 + $0x274] sm:$0xf]
    %v1835 = vld [vmem:[#allocation8 + $0x278] sm:$0xf]
    %v1836 = vld [vmem:[#allocation8 + $0x27c] sm:$0xf]
    %v1837 = vld [vmem:[#allocation8 + $0x280] sm:$0xf]
    %v1838 = vld [vmem:[#allocation8 + $0x284] sm:$0xf]
    %v1839 = vld [vmem:[#allocation8 + $0x288] sm:$0xf]
    %v1840 = vld [vmem:[#allocation8 + $0x28c] sm:$0xf]
    %v1841 = vld [vmem:[#allocation8 + $0x290] sm:$0xf]
    %v1842 = vld [vmem:[#allocation8 + $0x294] sm:$0xf]
    %v1843 = vld [vmem:[#allocation8 + $0x298] sm:$0xf]
    %v1844 = vld [vmem:[#allocation8 + $0x29c] sm:$0xf]
    %v1845 = vld [vmem:[#allocation8 + $0x2a0] sm:$0xf]
    %v1846 = vld [vmem:[#allocation8 + $0x2a4] sm:$0xf]
    %v1847 = vld [vmem:[#allocation8 + $0x2a8] sm:$0xf]
    %v1848 = vld [vmem:[#allocation8 + $0x2ac] sm:$0xf]
    %v1849 = vld [vmem:[#allocation8 + $0x2b0] sm:$0xf]
    %v1850 = vld [vmem:[#allocation8 + $0x2b4] sm:$0xf]
    %v1851 = vld [vmem:[#allocation8 + $0x2b8] sm:$0xf]
    %v1852 = vld [vmem:[#allocation8 + $0x2bc] sm:$0xf]
    %v1853 = vld [vmem:[#allocation8 + $0x2c0] sm:$0xf]
    %v1854 = vld [vmem:[#allocation8 + $0x2c4] sm:$0xf]
    %v1855 = vld [vmem:[#allocation8 + $0x2c8] sm:$0xf]
    %v1856 = vld [vmem:[#allocation8 + $0x2cc] sm:$0xf]
    %v1857 = vld [vmem:[#allocation8 + $0x2d0] sm:$0xf]
    %v1858 = vld [vmem:[#allocation8 + $0x2d4] sm:$0xf]
    %v1859 = vld [vmem:[#allocation8 + $0x2d8] sm:$0xf]
    %v1860 = vld [vmem:[#allocation8 + $0x2dc] sm:$0xf]
    %v1861 = vld [vmem:[#allocation8 + $0x2e0] sm:$0xf]
    %v1862 = vld [vmem:[#allocation8 + $0x2e4] sm:$0xf]
    %v1863 = vld [vmem:[#allocation8 + $0x2e8] sm:$0xf]
    %v1864 = vld [vmem:[#allocation8 + $0x2ec] sm:$0xf]
    %v1865 = vld [vmem:[#allocation8 + $0x2f0] sm:$0xf]
    %v1866 = vld [vmem:[#allocation8 + $0x2f4] sm:$0xf]
    %v1867 = vld [vmem:[#allocation8 + $0x2f8] sm:$0xf]
    %v1868 = vld [vmem:[#allocation8 + $0x2fc] sm:$0xf]
    %v1869 = vld [vmem:[#allocation8 + $0x300] sm:$0xf]
    %v1870 = vld [vmem:[#allocation8 + $0x304] sm:$0xf]
    %v1871 = vld [vmem:[#allocation8 + $0x308] sm:$0xf]
    %v1872 = vld [vmem:[#allocation8 + $0x30c] sm:$0xf]
    %v1873 = vld [vmem:[#allocation8 + $0x310] sm:$0xf]
    %v1874 = vld [vmem:[#allocation8 + $0x314] sm:$0xf]
    %v1875 = vld [vmem:[#allocation8 + $0x318] sm:$0xf]
    %v1876 = vld [vmem:[#allocation8 + $0x31c] sm:$0xf]
    %v1877 = vld [vmem:[#allocation8 + $0x320] sm:$0xf]
    %v1878 = vld [vmem:[#allocation8 + $0x324] sm:$0xf]
    %v1879 = vld [vmem:[#allocation8 + $0x328] sm:$0xf]
    %v1880 = vld [vmem:[#allocation8 + $0x32c] sm:$0xf]
    %v1881 = vld [vmem:[#allocation8 + $0x330] sm:$0xf]
    %v1882 = vld [vmem:[#allocation8 + $0x334] sm:$0xf]
    %v1883 = vld [vmem:[#allocation8 + $0x338] sm:$0xf]
    %v1884 = vld [vmem:[#allocation8 + $0x33c] sm:$0xf]
    %v1885 = vld [vmem:[#allocation8 + $0x340] sm:$0xf]
    %v1886 = vld [vmem:[#allocation8 + $0x344] sm:$0xf]
    %v1887 = vld [vmem:[#allocation8 + $0x348] sm:$0xf]
    %v1888 = vld [vmem:[#allocation8 + $0x34c] sm:$0xf]
    %v1889 = vld [vmem:[#allocation8 + $0x350] sm:$0xf]
    %v1890 = vld [vmem:[#allocation8 + $0x354] sm:$0xf]
    %v1891 = vld [vmem:[#allocation8 + $0x358] sm:$0xf]
    %v1892 = vld [vmem:[#allocation8 + $0x35c] sm:$0xf]
    %v1893 = vld [vmem:[#allocation8 + $0x360] sm:$0xf]
    %v1894 = vld [vmem:[#allocation8 + $0x364] sm:$0xf]
    %v1895 = vld [vmem:[#allocation8 + $0x368] sm:$0xf]
    %v1896 = vld [vmem:[#allocation8 + $0x36c] sm:$0xf]
    %v1897 = vld [vmem:[#allocation8 + $0x370] sm:$0xf]
    %v1898 = vld [vmem:[#allocation8 + $0x374] sm:$0xf]
    %v1899 = vld [vmem:[#allocation8 + $0x378] sm:$0xf]
    %v1900 = vld [vmem:[#allocation8 + $0x37c] sm:$0xf]
    %v1901 = vld [vmem:[#allocation8 + $0x380] sm:$0xf]
    %v1902 = vld [vmem:[#allocation8 + $0x384] sm:$0xf]
    %v1903 = vld [vmem:[#allocation8 + $0x388] sm:$0xf]
    %v1904 = vld [vmem:[#allocation8 + $0x38c] sm:$0xf]
    %v1905 = vld [vmem:[#allocation8 + $0x390] sm:$0xf]
    %v1906 = vld [vmem:[#allocation8 + $0x394] sm:$0xf]
    %v1907 = vld [vmem:[#allocation8 + $0x398] sm:$0xf]
    %v1908 = vld [vmem:[#allocation8 + $0x39c] sm:$0xf]
    %v1909 = vld [vmem:[#allocation8 + $0x3a0] sm:$0xf]
    %v1910 = vld [vmem:[#allocation8 + $0x3a4] sm:$0xf]
    %v1911 = vld [vmem:[#allocation8 + $0x3a8] sm:$0xf]
    %v1912 = vld [vmem:[#allocation8 + $0x3ac] sm:$0xf]
    %v1913 = vld [vmem:[#allocation8 + $0x3b0] sm:$0xf]
    %v1914 = vld [vmem:[#allocation8 + $0x3b4] sm:$0xf]
    %v1915 = vld [vmem:[#allocation8 + $0x3b8] sm:$0xf]
    %v1916 = vld [vmem:[#allocation8 + $0x3bc] sm:$0xf]
    %v1917 = vld [vmem:[#allocation8 + $0x3c0] sm:$0xf]
    %v1918 = vld [vmem:[#allocation8 + $0x3c4] sm:$0xf]
    %v1919 = vld [vmem:[#allocation8 + $0x3c8] sm:$0xf]
    %v1920 = vld [vmem:[#allocation8 + $0x3cc] sm:$0xf]
    %v1921 = vld [vmem:[#allocation8 + $0x3d0] sm:$0xf]
    %v1922 = vld [vmem:[#allocation8 + $0x3d4] sm:$0xf]
    %v1923 = vld [vmem:[#allocation8 + $0x3d8] sm:$0xf]
    %v1924 = vld [vmem:[#allocation8 + $0x3dc] sm:$0xf]
    %v1925 = vld [vmem:[#allocation8 + $0x3e0] sm:$0xf]
    %v1926 = vld [vmem:[#allocation8 + $0x3e4] sm:$0xf]
    %v1927 = vld [vmem:[#allocation8 + $0x3e8] sm:$0xf]
    %v1928 = vld [vmem:[#allocation8 + $0x3ec] sm:$0xf]
    %v1929 = vld [vmem:[#allocation8 + $0x3f0] sm:$0xf]
    %v1930 = vld [vmem:[#allocation8 + $0x3f4] sm:$0xf]
    %v1931 = vld [vmem:[#allocation8 + $0x3f8] sm:$0xf]
    %v1932 = vld [vmem:[#allocation8 + $0x3fc] sm:$0xf]
    %v1933 = vld [vmem:[%s4] sm:$0x1]
    %v1935 = vlaneseq
    %v1936 = vshrl.u32 %v1935, 7
    %v1937 = vsub.s32 0, %v1936
    %v1938 = vrot.slane %v1933, %v1937
    %v2196 = vunpack.c.l.b16 %v1677
    %v2197 = vunpack.c.l.b16 %v1678
    %v2198 = vunpack.c.l.b16 %v1679
    %v2199 = vunpack.c.l.b16 %v1680
    %v2200 = vunpack.c.l.b16 %v1681
    %v2201 = vunpack.c.l.b16 %v1682
    %v2202 = vunpack.c.l.b16 %v1683
    %v2203 = vunpack.c.l.b16 %v1684
    %v2204 = vunpack.c.l.b16 %v1685
    %v2205 = vunpack.c.l.b16 %v1686
    %v2206 = vunpack.c.l.b16 %v1687
    %v2207 = vunpack.c.l.b16 %v1688
    %v2208 = vunpack.c.l.b16 %v1689
    %v2209 = vunpack.c.l.b16 %v1690
    %v2210 = vunpack.c.l.b16 %v1691
    %v2211 = vunpack.c.l.b16 %v1692
    %v2212 = vunpack.c.l.b16 %v1693
    %v2213 = vunpack.c.l.b16 %v1694
    %v2214 = vunpack.c.l.b16 %v1695
    %v2215 = vunpack.c.l.b16 %v1696
    %v2216 = vunpack.c.l.b16 %v1697
    %v2217 = vunpack.c.l.b16 %v1698
    %v2218 = vunpack.c.l.b16 %v1699
    %v2219 = vunpack.c.l.b16 %v1700
    %v2220 = vunpack.c.l.b16 %v1701
    %v2221 = vunpack.c.l.b16 %v1702
    %v2222 = vunpack.c.l.b16 %v1703
    %v2223 = vunpack.c.l.b16 %v1704
    %v2224 = vunpack.c.l.b16 %v1705
    %v2225 = vunpack.c.l.b16 %v1706
    %v2226 = vunpack.c.l.b16 %v1707
    %v2227 = vunpack.c.l.b16 %v1708
    %v2228 = vunpack.c.l.b16 %v1709
    %v2229 = vunpack.c.l.b16 %v1710
    %v2230 = vunpack.c.l.b16 %v1711
    %v2231 = vunpack.c.l.b16 %v1712
    %v2232 = vunpack.c.l.b16 %v1713
    %v2233 = vunpack.c.l.b16 %v1714
    %v2234 = vunpack.c.l.b16 %v1715
    %v2235 = vunpack.c.l.b16 %v1716
    %v2236 = vunpack.c.l.b16 %v1717
    %v2237 = vunpack.c.l.b16 %v1718
    %v2238 = vunpack.c.l.b16 %v1719
    %v2239 = vunpack.c.l.b16 %v1720
    %v2240 = vunpack.c.l.b16 %v1721
    %v2241 = vunpack.c.l.b16 %v1722
    %v2242 = vunpack.c.l.b16 %v1723
    %v2243 = vunpack.c.l.b16 %v1724
    %v2244 = vunpack.c.l.b16 %v1725
    %v2245 = vunpack.c.l.b16 %v1726
    %v2246 = vunpack.c.l.b16 %v1727
    %v2247 = vunpack.c.l.b16 %v1728
    %v2248 = vunpack.c.l.b16 %v1729
    %v2249 = vunpack.c.l.b16 %v1730
    %v2250 = vunpack.c.l.b16 %v1731
    %v2251 = vunpack.c.l.b16 %v1732
    %v2252 = vunpack.c.l.b16 %v1733
    %v2253 = vunpack.c.l.b16 %v1734
    %v2254 = vunpack.c.l.b16 %v1735
    %v2255 = vunpack.c.l.b16 %v1736
    %v2256 = vunpack.c.l.b16 %v1737
    %v2257 = vunpack.c.l.b16 %v1738
    %v2258 = vunpack.c.l.b16 %v1739
    %v2259 = vunpack.c.l.b16 %v1740
    %v2260 = vunpack.c.l.b16 %v1741
    %v2261 = vunpack.c.l.b16 %v1742
    %v2262 = vunpack.c.l.b16 %v1743
    %v2263 = vunpack.c.l.b16 %v1744
    %v2264 = vunpack.c.l.b16 %v1745
    %v2265 = vunpack.c.l.b16 %v1746
    %v2266 = vunpack.c.l.b16 %v1747
    %v2267 = vunpack.c.l.b16 %v1748
    %v2268 = vunpack.c.l.b16 %v1749
    %v2269 = vunpack.c.l.b16 %v1750
    %v2270 = vunpack.c.l.b16 %v1751
    %v2271 = vunpack.c.l.b16 %v1752
    %v2272 = vunpack.c.l.b16 %v1753
    %v2273 = vunpack.c.l.b16 %v1754
    %v2274 = vunpack.c.l.b16 %v1755
    %v2275 = vunpack.c.l.b16 %v1756
    %v2276 = vunpack.c.l.b16 %v1757
    %v2277 = vunpack.c.l.b16 %v1758
    %v2278 = vunpack.c.l.b16 %v1759
    %v2279 = vunpack.c.l.b16 %v1760
    %v2280 = vunpack.c.l.b16 %v1761
    %v2281 = vunpack.c.l.b16 %v1762
    %v2282 = vunpack.c.l.b16 %v1763
    %v2283 = vunpack.c.l.b16 %v1764
    %v2284 = vunpack.c.l.b16 %v1765
    %v2285 = vunpack.c.l.b16 %v1766
    %v2286 = vunpack.c.l.b16 %v1767
    %v2287 = vunpack.c.l.b16 %v1768
    %v2288 = vunpack.c.l.b16 %v1769
    %v2289 = vunpack.c.l.b16 %v1770
    %v2290 = vunpack.c.l.b16 %v1771
    %v2291 = vunpack.c.l.b16 %v1772
    %v2292 = vunpack.c.l.b16 %v1773
    %v2293 = vunpack.c.l.b16 %v1774
    %v2294 = vunpack.c.l.b16 %v1775
    %v2295 = vunpack.c.l.b16 %v1776
    %v2296 = vunpack.c.l.b16 %v1777
    %v2297 = vunpack.c.l.b16 %v1778
    %v2298 = vunpack.c.l.b16 %v1779
    %v2299 = vunpack.c.l.b16 %v1780
    %v2300 = vunpack.c.l.b16 %v1781
    %v2301 = vunpack.c.l.b16 %v1782
    %v2302 = vunpack.c.l.b16 %v1783
    %v2303 = vunpack.c.l.b16 %v1784
    %v2304 = vunpack.c.l.b16 %v1785
    %v2305 = vunpack.c.l.b16 %v1786
    %v2306 = vunpack.c.l.b16 %v1787
    %v2307 = vunpack.c.l.b16 %v1788
    %v2308 = vunpack.c.l.b16 %v1789
    %v2309 = vunpack.c.l.b16 %v1790
    %v2310 = vunpack.c.l.b16 %v1791
    %v2311 = vunpack.c.l.b16 %v1792
    %v2312 = vunpack.c.l.b16 %v1793
    %v2313 = vunpack.c.l.b16 %v1794
    %v2314 = vunpack.c.l.b16 %v1795
    %v2315 = vunpack.c.l.b16 %v1796
    %v2316 = vunpack.c.l.b16 %v1797
    %v2317 = vunpack.c.l.b16 %v1798
    %v2318 = vunpack.c.l.b16 %v1799
    %v2319 = vunpack.c.l.b16 %v1800
    %v2320 = vunpack.c.l.b16 %v1801
    %v2321 = vunpack.c.l.b16 %v1802
    %v2322 = vunpack.c.l.b16 %v1803
    %v2323 = vunpack.c.l.b16 %v1804
    %v2324 = vunpack.c.l.b16 %v1805
    %v2325 = vunpack.c.l.b16 %v1806
    %v2326 = vunpack.c.l.b16 %v1807
    %v2327 = vunpack.c.l.b16 %v1808
    %v2328 = vunpack.c.l.b16 %v1809
    %v2329 = vunpack.c.l.b16 %v1810
    %v2330 = vunpack.c.l.b16 %v1811
    %v2331 = vunpack.c.l.b16 %v1812
    %v2332 = vunpack.c.l.b16 %v1813
    %v2333 = vunpack.c.l.b16 %v1814
    %v2334 = vunpack.c.l.b16 %v1815
    %v2335 = vunpack.c.l.b16 %v1816
    %v2336 = vunpack.c.l.b16 %v1817
    %v2337 = vunpack.c.l.b16 %v1818
    %v2338 = vunpack.c.l.b16 %v1819
    %v2339 = vunpack.c.l.b16 %v1820
    %v2340 = vunpack.c.l.b16 %v1821
    %v2341 = vunpack.c.l.b16 %v1822
    %v2342 = vunpack.c.l.b16 %v1823
    %v2343 = vunpack.c.l.b16 %v1824
    %v2344 = vunpack.c.l.b16 %v1825
    %v2345 = vunpack.c.l.b16 %v1826
    %v2346 = vunpack.c.l.b16 %v1827
    %v2347 = vunpack.c.l.b16 %v1828
    %v2348 = vunpack.c.l.b16 %v1829
    %v2349 = vunpack.c.l.b16 %v1830
    %v2350 = vunpack.c.l.b16 %v1831
    %v2351 = vunpack.c.l.b16 %v1832
    %v2352 = vunpack.c.l.b16 %v1833
    %v2353 = vunpack.c.l.b16 %v1834
    %v2354 = vunpack.c.l.b16 %v1835
    %v2355 = vunpack.c.l.b16 %v1836
    %v2356 = vunpack.c.l.b16 %v1837
    %v2357 = vunpack.c.l.b16 %v1838
    %v2358 = vunpack.c.l.b16 %v1839
    %v2359 = vunpack.c.l.b16 %v1840
    %v2360 = vunpack.c.l.b16 %v1841
    %v2361 = vunpack.c.l.b16 %v1842
    %v2362 = vunpack.c.l.b16 %v1843
    %v2363 = vunpack.c.l.b16 %v1844
    %v2364 = vunpack.c.l.b16 %v1845
    %v2365 = vunpack.c.l.b16 %v1846
    %v2366 = vunpack.c.l.b16 %v1847
    %v2367 = vunpack.c.l.b16 %v1848
    %v2368 = vunpack.c.l.b16 %v1849
    %v2369 = vunpack.c.l.b16 %v1850
    %v2370 = vunpack.c.l.b16 %v1851
    %v2371 = vunpack.c.l.b16 %v1852
    %v2372 = vunpack.c.l.b16 %v1853
    %v2373 = vunpack.c.l.b16 %v1854
    %v2374 = vunpack.c.l.b16 %v1855
    %v2375 = vunpack.c.l.b16 %v1856
    %v2376 = vunpack.c.l.b16 %v1857
    %v2377 = vunpack.c.l.b16 %v1858
    %v2378 = vunpack.c.l.b16 %v1859
    %v2379 = vunpack.c.l.b16 %v1860
    %v2380 = vunpack.c.l.b16 %v1861
    %v2381 = vunpack.c.l.b16 %v1862
    %v2382 = vunpack.c.l.b16 %v1863
    %v2383 = vunpack.c.l.b16 %v1864
    %v2384 = vunpack.c.l.b16 %v1865
    %v2385 = vunpack.c.l.b16 %v1866
    %v2386 = vunpack.c.l.b16 %v1867
    %v2387 = vunpack.c.l.b16 %v1868
    %v2388 = vunpack.c.l.b16 %v1869
    %v2389 = vunpack.c.l.b16 %v1870
    %v2390 = vunpack.c.l.b16 %v1871
    %v2391 = vunpack.c.l.b16 %v1872
    %v2392 = vunpack.c.l.b16 %v1873
    %v2393 = vunpack.c.l.b16 %v1874
    %v2394 = vunpack.c.l.b16 %v1875
    %v2395 = vunpack.c.l.b16 %v1876
    %v2396 = vunpack.c.l.b16 %v1877
    %v2397 = vunpack.c.l.b16 %v1878
    %v2398 = vunpack.c.l.b16 %v1879
    %v2399 = vunpack.c.l.b16 %v1880
    %v2400 = vunpack.c.l.b16 %v1881
    %v2401 = vunpack.c.l.b16 %v1882
    %v2402 = vunpack.c.l.b16 %v1883
    %v2403 = vunpack.c.l.b16 %v1884
    %v2404 = vunpack.c.l.b16 %v1885
    %v2405 = vunpack.c.l.b16 %v1886
    %v2406 = vunpack.c.l.b16 %v1887
    %v2407 = vunpack.c.l.b16 %v1888
    %v2408 = vunpack.c.l.b16 %v1889
    %v2409 = vunpack.c.l.b16 %v1890
    %v2410 = vunpack.c.l.b16 %v1891
    %v2411 = vunpack.c.l.b16 %v1892
    %v2412 = vunpack.c.l.b16 %v1893
    %v2413 = vunpack.c.l.b16 %v1894
    %v2414 = vunpack.c.l.b16 %v1895
    %v2415 = vunpack.c.l.b16 %v1896
    %v2416 = vunpack.c.l.b16 %v1897
    %v2417 = vunpack.c.l.b16 %v1898
    %v2418 = vunpack.c.l.b16 %v1899
    %v2419 = vunpack.c.l.b16 %v1900
    %v2420 = vunpack.c.l.b16 %v1901
    %v2421 = vunpack.c.l.b16 %v1902
    %v2422 = vunpack.c.l.b16 %v1903
    %v2423 = vunpack.c.l.b16 %v1904
    %v2424 = vunpack.c.l.b16 %v1905
    %v2425 = vunpack.c.l.b16 %v1906
    %v2426 = vunpack.c.l.b16 %v1907
    %v2427 = vunpack.c.l.b16 %v1908
    %v2428 = vunpack.c.l.b16 %v1909
    %v2429 = vunpack.c.l.b16 %v1910
    %v2430 = vunpack.c.l.b16 %v1911
    %v2431 = vunpack.c.l.b16 %v1912
    %v2432 = vunpack.c.l.b16 %v1913
    %v2433 = vunpack.c.l.b16 %v1914
    %v2434 = vunpack.c.l.b16 %v1915
    %v2435 = vunpack.c.l.b16 %v1916
    %v2436 = vunpack.c.l.b16 %v1917
    %v2437 = vunpack.c.l.b16 %v1918
    %v2438 = vunpack.c.l.b16 %v1919
    %v2439 = vunpack.c.l.b16 %v1920
    %v2440 = vunpack.c.l.b16 %v1921
    %v2441 = vunpack.c.l.b16 %v1922
    %v2442 = vunpack.c.l.b16 %v1923
    %v2443 = vunpack.c.l.b16 %v1924
    %v2444 = vunpack.c.l.b16 %v1925
    %v2445 = vunpack.c.l.b16 %v1926
    %v2446 = vunpack.c.l.b16 %v1927
    %v2447 = vunpack.c.l.b16 %v1928
    %v2448 = vunpack.c.l.b16 %v1929
    %v2449 = vunpack.c.l.b16 %v1930
    %v2450 = vunpack.c.l.b16 %v1931
    %v2451 = vunpack.c.l.b16 %v1932
    %v2452 = vpack.c.b16 %v2197, %v2196
    %v2453 = vpack.c.b16 %v2199, %v2198
    %v2454 = vpack.c.b16 %v2201, %v2200
    %v2455 = vpack.c.b16 %v2203, %v2202
    %v2456 = vpack.c.b16 %v2205, %v2204
    %v2457 = vpack.c.b16 %v2207, %v2206
    %v2458 = vpack.c.b16 %v2209, %v2208
    %v2459 = vpack.c.b16 %v2211, %v2210
    %v2460 = vpack.c.b16 %v2213, %v2212
    %v2461 = vpack.c.b16 %v2215, %v2214
    %v2462 = vpack.c.b16 %v2217, %v2216
    %v2463 = vpack.c.b16 %v2219, %v2218
    %v2464 = vpack.c.b16 %v2221, %v2220
    %v2465 = vpack.c.b16 %v2223, %v2222
    %v2466 = vpack.c.b16 %v2225, %v2224
    %v2467 = vpack.c.b16 %v2227, %v2226
    %v2468 = vpack.c.b16 %v2229, %v2228
    %v2469 = vpack.c.b16 %v2231, %v2230
    %v2470 = vpack.c.b16 %v2233, %v2232
    %v2471 = vpack.c.b16 %v2235, %v2234
    %v2472 = vpack.c.b16 %v2237, %v2236
    %v2473 = vpack.c.b16 %v2239, %v2238
    %v2474 = vpack.c.b16 %v2241, %v2240
    %v2475 = vpack.c.b16 %v2243, %v2242
    %v2476 = vpack.c.b16 %v2245, %v2244
    %v2477 = vpack.c.b16 %v2247, %v2246
    %v2478 = vpack.c.b16 %v2249, %v2248
    %v2479 = vpack.c.b16 %v2251, %v2250
    %v2480 = vpack.c.b16 %v2253, %v2252
    %v2481 = vpack.c.b16 %v2255, %v2254
    %v2482 = vpack.c.b16 %v2257, %v2256
    %v2483 = vpack.c.b16 %v2259, %v2258
    %v2484 = vpack.c.b16 %v2261, %v2260
    %v2485 = vpack.c.b16 %v2263, %v2262
    %v2486 = vpack.c.b16 %v2265, %v2264
    %v2487 = vpack.c.b16 %v2267, %v2266
    %v2488 = vpack.c.b16 %v2269, %v2268
    %v2489 = vpack.c.b16 %v2271, %v2270
    %v2490 = vpack.c.b16 %v2273, %v2272
    %v2491 = vpack.c.b16 %v2275, %v2274
    %v2492 = vpack.c.b16 %v2277, %v2276
    %v2493 = vpack.c.b16 %v2279, %v2278
    %v2494 = vpack.c.b16 %v2281, %v2280
    %v2495 = vpack.c.b16 %v2283, %v2282
    %v2496 = vpack.c.b16 %v2285, %v2284
    %v2497 = vpack.c.b16 %v2287, %v2286
    %v2498 = vpack.c.b16 %v2289, %v2288
    %v2499 = vpack.c.b16 %v2291, %v2290
    %v2500 = vpack.c.b16 %v2293, %v2292
    %v2501 = vpack.c.b16 %v2295, %v2294
    %v2502 = vpack.c.b16 %v2297, %v2296
    %v2503 = vpack.c.b16 %v2299, %v2298
    %v2504 = vpack.c.b16 %v2301, %v2300
    %v2505 = vpack.c.b16 %v2303, %v2302
    %v2506 = vpack.c.b16 %v2305, %v2304
    %v2507 = vpack.c.b16 %v2307, %v2306
    %v2508 = vpack.c.b16 %v2309, %v2308
    %v2509 = vpack.c.b16 %v2311, %v2310
    %v2510 = vpack.c.b16 %v2313, %v2312
    %v2511 = vpack.c.b16 %v2315, %v2314
    %v2512 = vpack.c.b16 %v2317, %v2316
    %v2513 = vpack.c.b16 %v2319, %v2318
    %v2514 = vpack.c.b16 %v2321, %v2320
    %v2515 = vpack.c.b16 %v2323, %v2322
    %v2516 = vpack.c.b16 %v2325, %v2324
    %v2517 = vpack.c.b16 %v2327, %v2326
    %v2518 = vpack.c.b16 %v2329, %v2328
    %v2519 = vpack.c.b16 %v2331, %v2330
    %v2520 = vpack.c.b16 %v2333, %v2332
    %v2521 = vpack.c.b16 %v2335, %v2334
    %v2522 = vpack.c.b16 %v2337, %v2336
    %v2523 = vpack.c.b16 %v2339, %v2338
    %v2524 = vpack.c.b16 %v2341, %v2340
    %v2525 = vpack.c.b16 %v2343, %v2342
    %v2526 = vpack.c.b16 %v2345, %v2344
    %v2527 = vpack.c.b16 %v2347, %v2346
    %v2528 = vpack.c.b16 %v2349, %v2348
    %v2529 = vpack.c.b16 %v2351, %v2350
    %v2530 = vpack.c.b16 %v2353, %v2352
    %v2531 = vpack.c.b16 %v2355, %v2354
    %v2532 = vpack.c.b16 %v2357, %v2356
    %v2533 = vpack.c.b16 %v2359, %v2358
    %v2534 = vpack.c.b16 %v2361, %v2360
    %v2535 = vpack.c.b16 %v2363, %v2362
    %v2536 = vpack.c.b16 %v2365, %v2364
    %v2537 = vpack.c.b16 %v2367, %v2366
    %v2538 = vpack.c.b16 %v2369, %v2368
    %v2539 = vpack.c.b16 %v2371, %v2370
    %v2540 = vpack.c.b16 %v2373, %v2372
    %v2541 = vpack.c.b16 %v2375, %v2374
    %v2542 = vpack.c.b16 %v2377, %v2376
    %v2543 = vpack.c.b16 %v2379, %v2378
    %v2544 = vpack.c.b16 %v2381, %v2380
    %v2545 = vpack.c.b16 %v2383, %v2382
    %v2546 = vpack.c.b16 %v2385, %v2384
    %v2547 = vpack.c.b16 %v2387, %v2386
    %v2548 = vpack.c.b16 %v2389, %v2388
    %v2549 = vpack.c.b16 %v2391, %v2390
    %v2550 = vpack.c.b16 %v2393, %v2392
    %v2551 = vpack.c.b16 %v2395, %v2394
    %v2552 = vpack.c.b16 %v2397, %v2396
    %v2553 = vpack.c.b16 %v2399, %v2398
    %v2554 = vpack.c.b16 %v2401, %v2400
    %v2555 = vpack.c.b16 %v2403, %v2402
    %v2556 = vpack.c.b16 %v2405, %v2404
    %v2557 = vpack.c.b16 %v2407, %v2406
    %v2558 = vpack.c.b16 %v2409, %v2408
    %v2559 = vpack.c.b16 %v2411, %v2410
    %v2560 = vpack.c.b16 %v2413, %v2412
    %v2561 = vpack.c.b16 %v2415, %v2414
    %v2562 = vpack.c.b16 %v2417, %v2416
    %v2563 = vpack.c.b16 %v2419, %v2418
    %v2564 = vpack.c.b16 %v2421, %v2420
    %v2565 = vpack.c.b16 %v2423, %v2422
    %v2566 = vpack.c.b16 %v2425, %v2424
    %v2567 = vpack.c.b16 %v2427, %v2426
    %v2568 = vpack.c.b16 %v2429, %v2428
    %v2569 = vpack.c.b16 %v2431, %v2430
    %v2570 = vpack.c.b16 %v2433, %v2432
    %v2571 = vpack.c.b16 %v2435, %v2434
    %v2572 = vpack.c.b16 %v2437, %v2436
    %v2573 = vpack.c.b16 %v2439, %v2438
    %v2574 = vpack.c.b16 %v2441, %v2440
    %v2575 = vpack.c.b16 %v2443, %v2442
    %v2576 = vpack.c.b16 %v2445, %v2444
    %v2577 = vpack.c.b16 %v2447, %v2446
    %v2578 = vpack.c.b16 %v2449, %v2448
    %v2579 = vpack.c.b16 %v2451, %v2450
    %2708 = vmatprep.subr.bf16.mxu0 0
    %2709 = vmatpush1.bf16.msra.mxu0 %v2459
    %2710 = vmatprep.subr.bf16.mxu0 0
    %2711 = vmatpush1.bf16.msra.mxu0 %v2458
    %2712 = vmatprep.subr.bf16.mxu0 0
    %2713 = vmatpush1.bf16.msra.mxu0 %v2457
    %2714 = vmatprep.subr.bf16.mxu0 0
    %2715 = vmatpush1.bf16.msra.mxu0 %v2456
    %2716 = vmatprep.subr.bf16.mxu0 0
    %2717 = vmatpush1.bf16.msra.mxu0 %v2455
    %2718 = vmatprep.subr.bf16.mxu0 0
    %2719 = vmatpush1.bf16.msra.mxu0 %v2454
    %2720 = vmatprep.subr.bf16.mxu0 0
    %2721 = vmatpush1.bf16.msra.mxu0 %v2453
    %2722 = vmatprep.subr.bf16.mxu0 0
    %2723 = vmatpush1.bf16.msra.mxu0 %v2452
    %2724 = vmatprep.subr.bf16.mxu0 0
    %2725 = vmatpush2.bf16.msra.mxu0 %v2467
    %2726 = vmatprep.subr.bf16.mxu0 0
    %2727 = vmatpush2.bf16.msra.mxu0 %v2466
    %2728 = vmatprep.subr.bf16.mxu0 0
    %2729 = vmatpush2.bf16.msra.mxu0 %v2465
    %2730 = vmatprep.subr.bf16.mxu0 0
    %2731 = vmatpush2.bf16.msra.mxu0 %v2464
    %2732 = vmatprep.subr.bf16.mxu0 0
    %2733 = vmatpush2.bf16.msra.mxu0 %v2463
    %2734 = vmatprep.subr.bf16.mxu0 0
    %2735 = vmatpush2.bf16.msra.mxu0 %v2462
    %2736 = vmatprep.subr.bf16.mxu0 0
    %2737 = vmatpush2.bf16.msra.mxu0 %v2461
    %2738 = vmatprep.subr.bf16.mxu0 0
    %2739 = vmatpush2.bf16.msra.mxu0 %v2460
    %2740 = vmatprep.mubr.bf16.mxu0 %v1662
    %2741 = vmatmul.mubr.bf16.gmra.mxu0 %v1661
    %v2742 = vpop.f32.mrf.mxu0
    %v2743 = vadd.f32 %v1938, %v2742
    %v2744 = vpop.f32.mrf.mxu0
    %v2745 = vpop.f32.mrf.mxu0
    %v2746 = vpop.f32.mrf.mxu0
    %2747 = vdwg.mxu0
    %2748 = vmatprep.subr.bf16.mxu0 0
    %2749 = vmatpush1.bf16.msra.mxu0 %v2475
    %2750 = vmatprep.subr.bf16.mxu0 0
    %2751 = vmatpush1.bf16.msra.mxu0 %v2474
    %2752 = vmatprep.subr.bf16.mxu0 0
    %2753 = vmatpush1.bf16.msra.mxu0 %v2473
    %2754 = vmatprep.subr.bf16.mxu0 0
    %2755 = vmatpush1.bf16.msra.mxu0 %v2472
    %2756 = vmatprep.subr.bf16.mxu0 0
    %2757 = vmatpush1.bf16.msra.mxu0 %v2471
    %2758 = vmatprep.subr.bf16.mxu0 0
    %2759 = vmatpush1.bf16.msra.mxu0 %v2470
    %2760 = vmatprep.subr.bf16.mxu0 0
    %2761 = vmatpush1.bf16.msra.mxu0 %v2469
    %2762 = vmatprep.subr.bf16.mxu0 0
    %2763 = vmatpush1.bf16.msra.mxu0 %v2468
    %2764 = vmatprep.subr.bf16.mxu0 0
    %2765 = vmatpush2.bf16.msra.mxu0 %v2483
    %2766 = vmatprep.subr.bf16.mxu0 0
    %2767 = vmatpush2.bf16.msra.mxu0 %v2482
    %2768 = vmatprep.subr.bf16.mxu0 0
    %2769 = vmatpush2.bf16.msra.mxu0 %v2481
    %2770 = vmatprep.subr.bf16.mxu0 0
    %2771 = vmatpush2.bf16.msra.mxu0 %v2480
    %2772 = vmatprep.subr.bf16.mxu0 0
    %2773 = vmatpush2.bf16.msra.mxu0 %v2479
    %2774 = vmatprep.subr.bf16.mxu0 0
    %2775 = vmatpush2.bf16.msra.mxu0 %v2478
    %2776 = vmatprep.subr.bf16.mxu0 0
    %2777 = vmatpush2.bf16.msra.mxu0 %v2477
    %2778 = vmatprep.subr.bf16.mxu0 0
    %2779 = vmatpush2.bf16.msra.mxu0 %v2476
    %2780 = vmatprep.mubr.bf16.mxu0 %v1664
    %2781 = vmatmul.mubr.bf16.gmra.mxu0 %v1663
    %v2782 = vpop.f32.mrf.mxu0
    %v2783 = vadd.f32 %v2743, %v2782
    %v2784 = vpop.f32.mrf.mxu0
    %v2785 = vpop.f32.mrf.mxu0
    %v2786 = vpop.f32.mrf.mxu0
    %2787 = vdwg.mxu0
    %2788 = vmatprep.subr.bf16.mxu0 0
    %2789 = vmatpush1.bf16.msra.mxu0 %v2491
    %2790 = vmatprep.subr.bf16.mxu0 0
    %2791 = vmatpush1.bf16.msra.mxu0 %v2490
    %2792 = vmatprep.subr.bf16.mxu0 0
    %2793 = vmatpush1.bf16.msra.mxu0 %v2489
    %2794 = vmatprep.subr.bf16.mxu0 0
    %2795 = vmatpush1.bf16.msra.mxu0 %v2488
    %2796 = vmatprep.subr.bf16.mxu0 0
    %2797 = vmatpush1.bf16.msra.mxu0 %v2487
    %2798 = vmatprep.subr.bf16.mxu0 0
    %2799 = vmatpush1.bf16.msra.mxu0 %v2486
    %2800 = vmatprep.subr.bf16.mxu0 0
    %2801 = vmatpush1.bf16.msra.mxu0 %v2485
    %2802 = vmatprep.subr.bf16.mxu0 0
    %2803 = vmatpush1.bf16.msra.mxu0 %v2484
    %2804 = vmatprep.subr.bf16.mxu0 0
    %2805 = vmatpush2.bf16.msra.mxu0 %v2499
    %2806 = vmatprep.subr.bf16.mxu0 0
    %2807 = vmatpush2.bf16.msra.mxu0 %v2498
    %2808 = vmatprep.subr.bf16.mxu0 0
    %2809 = vmatpush2.bf16.msra.mxu0 %v2497
    %2810 = vmatprep.subr.bf16.mxu0 0
    %2811 = vmatpush2.bf16.msra.mxu0 %v2496
    %2812 = vmatprep.subr.bf16.mxu0 0
    %2813 = vmatpush2.bf16.msra.mxu0 %v2495
    %2814 = vmatprep.subr.bf16.mxu0 0
    %2815 = vmatpush2.bf16.msra.mxu0 %v2494
    %2816 = vmatprep.subr.bf16.mxu0 0
    %2817 = vmatpush2.bf16.msra.mxu0 %v2493
    %2818 = vmatprep.subr.bf16.mxu0 0
    %2819 = vmatpush2.bf16.msra.mxu0 %v2492
    %2820 = vmatprep.mubr.bf16.mxu0 %v1666
    %2821 = vmatmul.mubr.bf16.gmra.mxu0 %v1665
    %v2822 = vpop.f32.mrf.mxu0
    %v2823 = vadd.f32 %v2783, %v2822
    %v2824 = vpop.f32.mrf.mxu0
    %v2825 = vpop.f32.mrf.mxu0
    %v2826 = vpop.f32.mrf.mxu0
    %2827 = vdwg.mxu0
    %2828 = vmatprep.subr.bf16.mxu0 0
    %2829 = vmatpush1.bf16.msra.mxu0 %v2507
    %2830 = vmatprep.subr.bf16.mxu0 0
    %2831 = vmatpush1.bf16.msra.mxu0 %v2506
    %2832 = vmatprep.subr.bf16.mxu0 0
    %2833 = vmatpush1.bf16.msra.mxu0 %v2505
    %2834 = vmatprep.subr.bf16.mxu0 0
    %2835 = vmatpush1.bf16.msra.mxu0 %v2504
    %2836 = vmatprep.subr.bf16.mxu0 0
    %2837 = vmatpush1.bf16.msra.mxu0 %v2503
    %2838 = vmatprep.subr.bf16.mxu0 0
    %2839 = vmatpush1.bf16.msra.mxu0 %v2502
    %2840 = vmatprep.subr.bf16.mxu0 0
    %2841 = vmatpush1.bf16.msra.mxu0 %v2501
    %2842 = vmatprep.subr.bf16.mxu0 0
    %2843 = vmatpush1.bf16.msra.mxu0 %v2500
    %2844 = vmatprep.subr.bf16.mxu0 0
    %2845 = vmatpush2.bf16.msra.mxu0 %v2515
    %2846 = vmatprep.subr.bf16.mxu0 0
    %2847 = vmatpush2.bf16.msra.mxu0 %v2514
    %2848 = vmatprep.subr.bf16.mxu0 0
    %2849 = vmatpush2.bf16.msra.mxu0 %v2513
    %2850 = vmatprep.subr.bf16.mxu0 0
    %2851 = vmatpush2.bf16.msra.mxu0 %v2512
    %2852 = vmatprep.subr.bf16.mxu0 0
    %2853 = vmatpush2.bf16.msra.mxu0 %v2511
    %2854 = vmatprep.subr.bf16.mxu0 0
    %2855 = vmatpush2.bf16.msra.mxu0 %v2510
    %2856 = vmatprep.subr.bf16.mxu0 0
    %2857 = vmatpush2.bf16.msra.mxu0 %v2509
    %2858 = vmatprep.subr.bf16.mxu0 0
    %2859 = vmatpush2.bf16.msra.mxu0 %v2508
    %2860 = vmatprep.mubr.bf16.mxu0 %v1668
    %2861 = vmatmul.mubr.bf16.gmra.mxu0 %v1667
    %v2862 = vpop.f32.mrf.mxu0
    %v2863 = vadd.f32 %v2823, %v2862
    %v2864 = vpop.f32.mrf.mxu0
    %v2865 = vpop.f32.mrf.mxu0
    %v2866 = vpop.f32.mrf.mxu0
    %2867 = vdwg.mxu0
    %2868 = vmatprep.subr.bf16.mxu0 0
    %2869 = vmatpush1.bf16.msra.mxu0 %v2523
    %2870 = vmatprep.subr.bf16.mxu0 0
    %2871 = vmatpush1.bf16.msra.mxu0 %v2522
    %2872 = vmatprep.subr.bf16.mxu0 0
    %2873 = vmatpush1.bf16.msra.mxu0 %v2521
    %2874 = vmatprep.subr.bf16.mxu0 0
    %2875 = vmatpush1.bf16.msra.mxu0 %v2520
    %2876 = vmatprep.subr.bf16.mxu0 0
    %2877 = vmatpush1.bf16.msra.mxu0 %v2519
    %2878 = vmatprep.subr.bf16.mxu0 0
    %2879 = vmatpush1.bf16.msra.mxu0 %v2518
    %2880 = vmatprep.subr.bf16.mxu0 0
    %2881 = vmatpush1.bf16.msra.mxu0 %v2517
    %2882 = vmatprep.subr.bf16.mxu0 0
    %2883 = vmatpush1.bf16.msra.mxu0 %v2516
    %2884 = vmatprep.subr.bf16.mxu0 0
    %2885 = vmatpush2.bf16.msra.mxu0 %v2531
    %2886 = vmatprep.subr.bf16.mxu0 0
    %2887 = vmatpush2.bf16.msra.mxu0 %v2530
    %2888 = vmatprep.subr.bf16.mxu0 0
    %2889 = vmatpush2.bf16.msra.mxu0 %v2529
    %2890 = vmatprep.subr.bf16.mxu0 0
    %2891 = vmatpush2.bf16.msra.mxu0 %v2528
    %2892 = vmatprep.subr.bf16.mxu0 0
    %2893 = vmatpush2.bf16.msra.mxu0 %v2527
    %2894 = vmatprep.subr.bf16.mxu0 0
    %2895 = vmatpush2.bf16.msra.mxu0 %v2526
    %2896 = vmatprep.subr.bf16.mxu0 0
    %2897 = vmatpush2.bf16.msra.mxu0 %v2525
    %2898 = vmatprep.subr.bf16.mxu0 0
    %2899 = vmatpush2.bf16.msra.mxu0 %v2524
    %2900 = vmatprep.mubr.bf16.mxu0 %v1670
    %2901 = vmatmul.mubr.bf16.gmra.mxu0 %v1669
    %v2902 = vpop.f32.mrf.mxu0
    %v2903 = vadd.f32 %v2863, %v2902
    %v2904 = vpop.f32.mrf.mxu0
    %v2905 = vpop.f32.mrf.mxu0
    %v2906 = vpop.f32.mrf.mxu0
    %2907 = vdwg.mxu0
    %2908 = vmatprep.subr.bf16.mxu0 0
    %2909 = vmatpush1.bf16.msra.mxu0 %v2539
    %2910 = vmatprep.subr.bf16.mxu0 0
    %2911 = vmatpush1.bf16.msra.mxu0 %v2538
    %2912 = vmatprep.subr.bf16.mxu0 0
    %2913 = vmatpush1.bf16.msra.mxu0 %v2537
    %2914 = vmatprep.subr.bf16.mxu0 0
    %2915 = vmatpush1.bf16.msra.mxu0 %v2536
    %2916 = vmatprep.subr.bf16.mxu0 0
    %2917 = vmatpush1.bf16.msra.mxu0 %v2535
    %2918 = vmatprep.subr.bf16.mxu0 0
    %2919 = vmatpush1.bf16.msra.mxu0 %v2534
    %2920 = vmatprep.subr.bf16.mxu0 0
    %2921 = vmatpush1.bf16.msra.mxu0 %v2533
    %2922 = vmatprep.subr.bf16.mxu0 0
    %2923 = vmatpush1.bf16.msra.mxu0 %v2532
    %2924 = vmatprep.subr.bf16.mxu0 0
    %2925 = vmatpush2.bf16.msra.mxu0 %v2547
    %2926 = vmatprep.subr.bf16.mxu0 0
    %2927 = vmatpush2.bf16.msra.mxu0 %v2546
    %2928 = vmatprep.subr.bf16.mxu0 0
    %2929 = vmatpush2.bf16.msra.mxu0 %v2545
    %2930 = vmatprep.subr.bf16.mxu0 0
    %2931 = vmatpush2.bf16.msra.mxu0 %v2544
    %2932 = vmatprep.subr.bf16.mxu0 0
    %2933 = vmatpush2.bf16.msra.mxu0 %v2543
    %2934 = vmatprep.subr.bf16.mxu0 0
    %2935 = vmatpush2.bf16.msra.mxu0 %v2542
    %2936 = vmatprep.subr.bf16.mxu0 0
    %2937 = vmatpush2.bf16.msra.mxu0 %v2541
    %2938 = vmatprep.subr.bf16.mxu0 0
    %2939 = vmatpush2.bf16.msra.mxu0 %v2540
    %2940 = vmatprep.mubr.bf16.mxu0 %v1672
    %2941 = vmatmul.mubr.bf16.gmra.mxu0 %v1671
    %v2942 = vpop.f32.mrf.mxu0
    %v2943 = vadd.f32 %v2903, %v2942
    %v2944 = vpop.f32.mrf.mxu0
    %v2945 = vpop.f32.mrf.mxu0
    %v2946 = vpop.f32.mrf.mxu0
    %2947 = vdwg.mxu0
    %2948 = vmatprep.subr.bf16.mxu0 0
    %2949 = vmatpush1.bf16.msra.mxu0 %v2555
    %2950 = vmatprep.subr.bf16.mxu0 0
    %2951 = vmatpush1.bf16.msra.mxu0 %v2554
    %2952 = vmatprep.subr.bf16.mxu0 0
    %2953 = vmatpush1.bf16.msra.mxu0 %v2553
    %2954 = vmatprep.subr.bf16.mxu0 0
    %2955 = vmatpush1.bf16.msra.mxu0 %v2552
    %2956 = vmatprep.subr.bf16.mxu0 0
    %2957 = vmatpush1.bf16.msra.mxu0 %v2551
    %2958 = vmatprep.subr.bf16.mxu0 0
    %2959 = vmatpush1.bf16.msra.mxu0 %v2550
    %2960 = vmatprep.subr.bf16.mxu0 0
    %2961 = vmatpush1.bf16.msra.mxu0 %v2549
    %2962 = vmatprep.subr.bf16.mxu0 0
    %2963 = vmatpush1.bf16.msra.mxu0 %v2548
    %2964 = vmatprep.subr.bf16.mxu0 0
    %2965 = vmatpush2.bf16.msra.mxu0 %v2563
    %2966 = vmatprep.subr.bf16.mxu0 0
    %2967 = vmatpush2.bf16.msra.mxu0 %v2562
    %2968 = vmatprep.subr.bf16.mxu0 0
    %2969 = vmatpush2.bf16.msra.mxu0 %v2561
    %2970 = vmatprep.subr.bf16.mxu0 0
    %2971 = vmatpush2.bf16.msra.mxu0 %v2560
    %2972 = vmatprep.subr.bf16.mxu0 0
    %2973 = vmatpush2.bf16.msra.mxu0 %v2559
    %2974 = vmatprep.subr.bf16.mxu0 0
    %2975 = vmatpush2.bf16.msra.mxu0 %v2558
    %2976 = vmatprep.subr.bf16.mxu0 0
    %2977 = vmatpush2.bf16.msra.mxu0 %v2557
    %2978 = vmatprep.subr.bf16.mxu0 0
    %2979 = vmatpush2.bf16.msra.mxu0 %v2556
    %2980 = vmatprep.mubr.bf16.mxu0 %v1674
    %2981 = vmatmul.mubr.bf16.gmra.mxu0 %v1673
    %v2982 = vpop.f32.mrf.mxu0
    %v2983 = vadd.f32 %v2943, %v2982
    %v2984 = vpop.f32.mrf.mxu0
    %v2985 = vpop.f32.mrf.mxu0
    %v2986 = vpop.f32.mrf.mxu0
    %2987 = vdwg.mxu0
    %2988 = vmatprep.subr.bf16.mxu0 0
    %2989 = vmatpush1.bf16.msra.mxu0 %v2571
    %2990 = vmatprep.subr.bf16.mxu0 0
    %2991 = vmatpush1.bf16.msra.mxu0 %v2570
    %2992 = vmatprep.subr.bf16.mxu0 0
    %2993 = vmatpush1.bf16.msra.mxu0 %v2569
    %2994 = vmatprep.subr.bf16.mxu0 0
    %2995 = vmatpush1.bf16.msra.mxu0 %v2568
    %2996 = vmatprep.subr.bf16.mxu0 0
    %2997 = vmatpush1.bf16.msra.mxu0 %v2567
    %2998 = vmatprep.subr.bf16.mxu0 0
    %2999 = vmatpush1.bf16.msra.mxu0 %v2566
    %3000 = vmatprep.subr.bf16.mxu0 0
    %3001 = vmatpush1.bf16.msra.mxu0 %v2565
    %3002 = vmatprep.subr.bf16.mxu0 0
    %3003 = vmatpush1.bf16.msra.mxu0 %v2564
    %3004 = vmatprep.subr.bf16.mxu0 0
    %3005 = vmatpush2.bf16.msra.mxu0 %v2579
    %3006 = vmatprep.subr.bf16.mxu0 0
    %3007 = vmatpush2.bf16.msra.mxu0 %v2578
    %3008 = vmatprep.subr.bf16.mxu0 0
    %3009 = vmatpush2.bf16.msra.mxu0 %v2577
    %3010 = vmatprep.subr.bf16.mxu0 0
    %3011 = vmatpush2.bf16.msra.mxu0 %v2576
    %3012 = vmatprep.subr.bf16.mxu0 0
    %3013 = vmatpush2.bf16.msra.mxu0 %v2575
    %3014 = vmatprep.subr.bf16.mxu0 0
    %3015 = vmatpush2.bf16.msra.mxu0 %v2574
    %3016 = vmatprep.subr.bf16.mxu0 0
    %3017 = vmatpush2.bf16.msra.mxu0 %v2573
    %3018 = vmatprep.subr.bf16.mxu0 0
    %3019 = vmatpush2.bf16.msra.mxu0 %v2572
    %3020 = vmatprep.mubr.bf16.mxu0 %v1676
    %3021 = vmatmul.mubr.bf16.gmra.mxu0 %v1675
    %v3022 = vpop.f32.mrf.mxu0
    %v3023 = vadd.f32 %v2983, %v3022
    %v3024 = vpop.f32.mrf.mxu0
    %v3025 = vpop.f32.mrf.mxu0
    %v3026 = vpop.f32.mrf.mxu0
    %3027 = vdwg.mxu0
    %3028 = vst [vmem:[#allocation10] sm:$0xff] %v3023
    // Predicated region
    $region38: #{tpu_custom_call.1} parent=1 // pred_check
      _
    $region39: #{tpu_custom_call.1} parent=1 // pred_check_branch
      %3030 = sbr.rel (0) target = $region41
    $region40: #{tpu_custom_call.1} parent=1 // pred_region
      %s3032 = ssub.s32 128, 128
      %3033 = vsyncadd [#allocation4], %s3032
      %s3035 = sshll.u32 [#allocation10], 4
      %s3036 = int_to_ptr.vmem [resolvable:$true] %s3035
      %3038 = dma.vmem_to_hbm [thread:$0]  %s3036, 128, %s5, [#allocation4]
    $region41: #{tpu_custom_call.1} parent=1 // pred_fallthru
      _
    // Predicated region
    $region42: #{tpu_custom_call.1} parent=1 // pred_check
      _
    $region43: #{tpu_custom_call.1} parent=1 // pred_check_branch
      %3040 = sbr.rel (0) target = $region45
    $region44: #{tpu_custom_call.1} parent=1 // pred_region
      %3041 = dma.done [#allocation4], 128
    $region45: #{tpu_custom_call.1} parent=1 // pred_fallthru
      _
    %3042 = vsyncpa [#allocation3], 1
    %3043 = vsyncpa [#allocation6], 1
    %3044 = vsyncpa [#allocation9], 1
    %3045 = vsyncpa [#allocation4], 1

</llo_original>
